<compile_context>
chip_gen: v7x
topology: tpu7x:2x2x1
jax: 0.10.0
libtpu: 0.0.40
codegen_flags: <defaults>
</compile_context>

<pallas_src>
import math

import numpy as np
import jax
import jax.numpy as jnp
from jax.experimental import pallas as pl
from jax.experimental.pallas import tpu as pltpu


# ----------------------------- Pallas kernel --------------------------------
def _vdlstm_kernel(x_ref, wih_ref, whh_ref, b_ref, wproj_ref, out_ref):
    # x_ref    : (B, T, F)   native batch-first input, F >= 30
    # wih_ref  : (15, 4G)    LSTM input weights, transposed, gate order i,f,o,g
    # whh_ref  : (G, 4G)     LSTM recurrent weights, transposed, gate order i,f,o,g
    # b_ref    : (1, 4G)     b_ih + b_hh, gate order i,f,o,g
    # wproj_ref: (G, 60)     [wI1 | wI2 | wQ1 | wQ2] each (G, 15)
    # out_ref  : (B, 2B)
    B, T, _ = x_ref.shape
    G = whh_ref.shape[0]

    x = x_ref[...]                     # whole (tiny) input resident in vregs
    wih = wih_ref[...]                 # (15, 4G)
    whh = whh_ref[...]                 # (G, 4G)
    b = b_ref[...]                     # (1, 4G)

    # ---- Hoisted input projection + fused bias: ONE MXU dot for all T steps.
    x_l = x.reshape(B * T, x.shape[2])[:, :15]                          # (B*T, 15)
    xw = (jnp.dot(x_l, wih, preferred_element_type=jnp.float32) + b
          ).reshape(B, T, 4 * G)                                        # (B, T, 4G)

    # ---- Fully unrolled recurrence: only h @ whh remains per serial step.
    h = jnp.zeros((B, G), jnp.float32)
    c = jnp.zeros((B, G), jnp.float32)
    for t in range(T):                                                  # T static
        gates = xw[:, t, :] + jnp.dot(h, whh,
                                      preferred_element_type=jnp.float32)
        sg = jax.nn.sigmoid(gates[:, : 3 * G])   # i | f | o : one EUP sigmoid
        gg = jnp.tanh(gates[:, 3 * G:])          # g         : one EUP tanh
        c = sg[:, G:2 * G] * c + sg[:, :G] * gg
        h = sg[:, 2 * G:3 * G] * jnp.tanh(c)

    # ---- Fused epilogue: theta from the last timestep, two A @ B.T MXU dots.
    theta = x[:, T - 1, 15:30]                                          # (B, 15)
    cs = jnp.concatenate([jnp.cos(theta), jnp.sin(theta)], axis=1)      # (B, 30)

    P = jnp.dot(h, wproj_ref[...], preferred_element_type=jnp.float32)  # (B, 60)
    dn = (((1,), (1,)), ((), ()))          # contract last dims: A @ B.T
    I_out = jax.lax.dot_general(P[:, :30], cs, dn,
                                preferred_element_type=jnp.float32)     # (B, B)
    Q_out = jax.lax.dot_general(P[:, 30:], cs, dn,
                                preferred_element_type=jnp.float32)     # (B, B)

    # Direct sliced stores (no concatenate copy before the output write).
    out_ref[:, :B] = I_out.astype(out_ref.dtype)
    out_ref[:, B:] = Q_out.astype(out_ref.dtype)


# ------------------------------- wrapper -------------------------------------
@jax.jit
def vdlstm_forward(x, wih_t, whh_t, b, wproj):
    # x stays in native (B, T, F) layout — no wrapper-side transpose/cast.
    B, T, F = x.shape
    out_shape = jax.ShapeDtypeStruct((B, 2 * B), jnp.float32)
    vmem = lambda: pl.BlockSpec(memory_space=pltpu.MemorySpace.VMEM)
    # Whole arrays are tiny (<< v5e's 16 MiB scoped VMEM), so they stay fully
    # resident; a T-tiled grid / batch-parallel grid only pays off at scale.
    return pl.pallas_call(
        _vdlstm_kernel,
        out_shape=out_shape,
        in_specs=[vmem() for _ in range(5)],
        out_specs=vmem(),
    )(x, wih_t, whh_t, b, wproj)


# --------------------------- parameter setup ---------------------------------
def init_params(key, M=15, G=32):
    ks = jax.random.split(key, 8)
    s = 1.0 / math.sqrt(G)
    w_ih = jax.random.uniform(ks[0], (4 * G, 15), jnp.float32, -s, s)
    w_hh = jax.random.uniform(ks[1], (4 * G, G), jnp.float32, -s, s)
    b_ih = jax.random.uniform(ks[2], (4 * G,), jnp.float32, -s, s)
    b_hh = jax.random.uniform(ks[3], (4 * G,), jnp.float32, -s, s)
    wI1 = jax.random.uniform(ks[4], (M, G), jnp.float32, -s, s)
    wI2 = jax.random.uniform(ks[5], (M, G), jnp.float32, -s, s)
    wQ1 = jax.random.uniform(ks[6], (M, G), jnp.float32, -s, s)
    wQ2 = jax.random.uniform(ks[7], (M, G), jnp.float32, -s, s)
    # NOTE: self.OI / self.OQ (Linear(2M,1)) exist in __init__ but are never used
    # in forward(), so they are not materialized here.
    return dict(w_ih=w_ih, w_hh=w_hh, b_ih=b_ih, b_hh=b_hh,
                wI1=wI1, wI2=wI2, wQ1=wQ1, wQ2=wQ2)


def _reorder_ifgo_to_ifog(w, G):
    # Row blocks of w are in PyTorch LSTM order [i, f, g, o]; reorder to
    # [i, f, o, g] so the kernel can apply one sigmoid over lanes 0:3G and one
    # tanh over lanes 3G:4G.
    return jnp.concatenate([w[: 2 * G], w[3 * G:], w[2 * G:3 * G]], axis=0)


# -------------------------- pure-JAX reference --------------------------------
def reference_forward(x, p):
    B, T, F = x.shape
    G = p["w_hh"].shape[1]
    x_l = x[:, :, :15]
    theta = x[:, -1, 15:]
    cos_t, sin_t = jnp.cos(theta), jnp.sin(theta)

    def step(carry, x_t):
        h, c = carry
        gates = x_t @ p["w_ih"].T + h @ p["w_hh"].T + p["b_ih"] + p["b_hh"]
        i = jax.nn.sigmoid(gates[:, :G])
        f = jax.nn.sigmoid(gates[:, G:2 * G])
        g = jnp.tanh(gates[:, 2 * G:3 * G])
        o = jax.nn.sigmoid(gates[:, 3 * G:])
        c = f * c + i * g
        h = o * jnp.tanh(c)
        return (h, c), None

    (h, _), _ = jax.lax.scan(step,
                             (jnp.zeros((B, G), jnp.float32),
                              jnp.zeros((B, G), jnp.float32)),
                             jnp.transpose(x_l, (1, 0, 2)))
    I_out, Q_out = 0.0, 0.0
    for i in range(15):
        # replicate the PyTorch broadcast: (B,1) * (B,) -> (B,B)
        I_out = I_out + (h @ p["wI1"][i][:, None]) * cos_t[:, i] \
                      + (h @ p["wI2"][i][:, None]) * sin_t[:, i]
        Q_out = Q_out + (h @ p["wQ1"][i][:, None]) * cos_t[:, i] \
                      + (h @ p["wQ2"][i][:, None]) * sin_t[:, i]
    return jnp.concatenate([I_out, Q_out], axis=1)


# --------------------------------- main ---------------------------------------
if __name__ == "__main__":
    B, T, F, M, G = 2, 8, 30, 15, 32   # F = 15 LSTM feats + 15 thetas
    key = jax.random.PRNGKey(0)
    kx, kp = jax.random.split(key)
    x = jax.random.normal(kx, (B, T, F), jnp.float32)
    p = init_params(kp, M=M, G=G)

    # Pre-transposed / fused / gate-reordered weights for the kernel.
    wih_k = _reorder_ifgo_to_ifog(p["w_ih"], G).T                        # (15, 4G)
    whh_k = _reorder_ifgo_to_ifog(p["w_hh"], G).T                        # (G, 4G)
    b_k = _reorder_ifgo_to_ifog((p["b_ih"] + p["b_hh"])[:, None], G).T   # (1, 4G)
    wproj = jnp.concatenate(
        [p["wI1"].T, p["wI2"].T, p["wQ1"].T, p["wQ2"].T], axis=1)        # (G, 60)

    out = vdlstm_forward(x, wih_k, whh_k, b_k, wproj)
    out = jax.block_until_ready(out)

    ref = reference_forward(x, p)
    np.testing.assert_allclose(np.asarray(out), np.asarray(ref),
                               rtol=1e-4, atol=1e-5)
    print("KERNEL_OK")
</pallas_src>

<mosaic_0001>
module attributes {stable_mosaic.version = 11 : i64} {
  func.func @_vdlstm_kernel(%arg0: memref<2x8x30xf32, #tpu.memory_space<vmem>>, %arg1: memref<15x128xf32, #tpu.memory_space<vmem>>, %arg2: memref<32x128xf32, #tpu.memory_space<vmem>>, %arg3: memref<1x128xf32, #tpu.memory_space<vmem>>, %arg4: memref<32x60xf32, #tpu.memory_space<vmem>>, %arg5: memref<2x4xf32, #tpu.memory_space<vmem>>) attributes {dimension_semantics = [], scalar_prefetch = 0 : i64, scratch_operands = 0 : i64, tpu.core_type = #tpu.core_type<tc>} {
    %c0 = arith.constant 0 : index
    %c0_0 = arith.constant 0 : index
    %c0_1 = arith.constant 0 : index
    %0 = vector.load %arg0[%c0, %c0_0, %c0_1] : memref<2x8x30xf32, #tpu.memory_space<vmem>>, vector<2x8x30xf32>
    %c0_2 = arith.constant 0 : index
    %c0_3 = arith.constant 0 : index
    %1 = vector.load %arg1[%c0_2, %c0_3] : memref<15x128xf32, #tpu.memory_space<vmem>>, vector<15x128xf32>
    %c0_4 = arith.constant 0 : index
    %c0_5 = arith.constant 0 : index
    %2 = vector.load %arg2[%c0_4, %c0_5] : memref<32x128xf32, #tpu.memory_space<vmem>>, vector<32x128xf32>
    %c0_6 = arith.constant 0 : index
    %c0_7 = arith.constant 0 : index
    %3 = vector.load %arg3[%c0_6, %c0_7] : memref<1x128xf32, #tpu.memory_space<vmem>>, vector<1x128xf32>
    %4 = vector.shape_cast %0 : vector<2x8x30xf32> to vector<16x30xf32>
    %5 = vector.extract_strided_slice %4 {offsets = [0, 0], sizes = [16, 15], strides = [1, 1]} : vector<16x30xf32> to vector<16x15xf32>
    %cst = arith.constant dense<0.000000e+00> : vector<16x128xf32>
    %6 = tpu.matmul %5, %1, %cst {dimension_numbers = #tpu.dot_dimension_numbers<[1], [0], [0], [1], [0, 0, 1, 1], [], []>} : vector<16x15xf32>, vector<15x128xf32>, vector<16x128xf32> -> vector<16x128xf32>
    %7 = vector.broadcast %3 : vector<1x128xf32> to vector<16x128xf32>
    %8 = arith.addf %6, %7 : vector<16x128xf32>
    %9 = vector.shape_cast %8 : vector<16x128xf32> to vector<2x8x128xf32>
    %cst_8 = arith.constant 0.000000e+00 : f32
    %10 = vector.broadcast %cst_8 : f32 to vector<2x32xf32>
    %cst_9 = arith.constant 0.000000e+00 : f32
    %11 = vector.broadcast %cst_9 : f32 to vector<2x32xf32>
    %12 = vector.extract_strided_slice %9 {offsets = [0, 0, 0], sizes = [2, 1, 128], strides = [1, 1, 1]} : vector<2x8x128xf32> to vector<2x1x128xf32>
    %13 = vector.shape_cast %12 : vector<2x1x128xf32> to vector<2x128xf32>
    %cst_10 = arith.constant dense<0.000000e+00> : vector<2x128xf32>
    %14 = tpu.matmul %10, %2, %cst_10 {dimension_numbers = #tpu.dot_dimension_numbers<[1], [0], [0], [1], [0, 0, 1, 1], [], []>} : vector<2x32xf32>, vector<32x128xf32>, vector<2x128xf32> -> vector<2x128xf32>
    %15 = arith.addf %13, %14 : vector<2x128xf32>
    %16 = vector.extract_strided_slice %15 {offsets = [0, 0], sizes = [2, 96], strides = [1, 1]} : vector<2x128xf32> to vector<2x96xf32>
    %17 = arith.negf %16 : vector<2x96xf32>
    %18 = math.exp %17 : vector<2x96xf32>
    %cst_11 = arith.constant 1.000000e+00 : f32
    %19 = vector.broadcast %cst_11 : f32 to vector<2x96xf32>
    %20 = arith.addf %19, %18 : vector<2x96xf32>
    %21 = arith.divf %19, %20 : vector<2x96xf32>
    %22 = vector.extract_strided_slice %15 {offsets = [0, 96], sizes = [2, 32], strides = [1, 1]} : vector<2x128xf32> to vector<2x32xf32>
    %23 = math.tanh %22 : vector<2x32xf32>
    %24 = vector.extract_strided_slice %21 {offsets = [0, 32], sizes = [2, 32], strides = [1, 1]} : vector<2x96xf32> to vector<2x32xf32>
    %25 = arith.mulf %24, %11 : vector<2x32xf32>
    %26 = vector.extract_strided_slice %21 {offsets = [0, 0], sizes = [2, 32], strides = [1, 1]} : vector<2x96xf32> to vector<2x32xf32>
    %27 = arith.mulf %26, %23 : vector<2x32xf32>
    %28 = arith.addf %25, %27 : vector<2x32xf32>
    %29 = vector.extract_strided_slice %21 {offsets = [0, 64], sizes = [2, 32], strides = [1, 1]} : vector<2x96xf32> to vector<2x32xf32>
    %30 = math.tanh %28 : vector<2x32xf32>
    %31 = arith.mulf %29, %30 : vector<2x32xf32>
    %32 = vector.extract_strided_slice %9 {offsets = [0, 1, 0], sizes = [2, 1, 128], strides = [1, 1, 1]} : vector<2x8x128xf32> to vector<2x1x128xf32>
    %33 = vector.shape_cast %32 : vector<2x1x128xf32> to vector<2x128xf32>
    %cst_12 = arith.constant dense<0.000000e+00> : vector<2x128xf32>
    %34 = tpu.matmul %31, %2, %cst_12 {dimension_numbers = #tpu.dot_dimension_numbers<[1], [0], [0], [1], [0, 0, 1, 1], [], []>} : vector<2x32xf32>, vector<32x128xf32>, vector<2x128xf32> -> vector<2x128xf32>
    %35 = arith.addf %33, %34 : vector<2x128xf32>
    %36 = vector.extract_strided_slice %35 {offsets = [0, 0], sizes = [2, 96], strides = [1, 1]} : vector<2x128xf32> to vector<2x96xf32>
    %37 = arith.negf %36 : vector<2x96xf32>
    %38 = math.exp %37 : vector<2x96xf32>
    %cst_13 = arith.constant 1.000000e+00 : f32
    %39 = vector.broadcast %cst_13 : f32 to vector<2x96xf32>
    %40 = arith.addf %39, %38 : vector<2x96xf32>
    %41 = arith.divf %39, %40 : vector<2x96xf32>
    %42 = vector.extract_strided_slice %35 {offsets = [0, 96], sizes = [2, 32], strides = [1, 1]} : vector<2x128xf32> to vector<2x32xf32>
    %43 = math.tanh %42 : vector<2x32xf32>
    %44 = vector.extract_strided_slice %41 {offsets = [0, 32], sizes = [2, 32], strides = [1, 1]} : vector<2x96xf32> to vector<2x32xf32>
    %45 = arith.mulf %44, %28 : vector<2x32xf32>
    %46 = vector.extract_strided_slice %41 {offsets = [0, 0], sizes = [2, 32], strides = [1, 1]} : vector<2x96xf32> to vector<2x32xf32>
    %47 = arith.mulf %46, %43 : vector<2x32xf32>
    %48 = arith.addf %45, %47 : vector<2x32xf32>
    %49 = vector.extract_strided_slice %41 {offsets = [0, 64], sizes = [2, 32], strides = [1, 1]} : vector<2x96xf32> to vector<2x32xf32>
    %50 = math.tanh %48 : vector<2x32xf32>
    %51 = arith.mulf %49, %50 : vector<2x32xf32>
    %52 = vector.extract_strided_slice %9 {offsets = [0, 2, 0], sizes = [2, 1, 128], strides = [1, 1, 1]} : vector<2x8x128xf32> to vector<2x1x128xf32>
    %53 = vector.shape_cast %52 : vector<2x1x128xf32> to vector<2x128xf32>
    %cst_14 = arith.constant dense<0.000000e+00> : vector<2x128xf32>
    %54 = tpu.matmul %51, %2, %cst_14 {dimension_numbers = #tpu.dot_dimension_numbers<[1], [0], [0], [1], [0, 0, 1, 1], [], []>} : vector<2x32xf32>, vector<32x128xf32>, vector<2x128xf32> -> vector<2x128xf32>
    %55 = arith.addf %53, %54 : vector<2x128xf32>
    %56 = vector.extract_strided_slice %55 {offsets = [0, 0], sizes = [2, 96], strides = [1, 1]} : vector<2x128xf32> to vector<2x96xf32>
    %57 = arith.negf %56 : vector<2x96xf32>
    %58 = math.exp %57 : vector<2x96xf32>
    %cst_15 = arith.constant 1.000000e+00 : f32
    %59 = vector.broadcast %cst_15 : f32 to vector<2x96xf32>
    %60 = arith.addf %59, %58 : vector<2x96xf32>
    %61 = arith.divf %59, %60 : vector<2x96xf32>
    %62 = vector.extract_strided_slice %55 {offsets = [0, 96], sizes = [2, 32], strides = [1, 1]} : vector<2x128xf32> to vector<2x32xf32>
    %63 = math.tanh %62 : vector<2x32xf32>
    %64 = vector.extract_strided_slice %61 {offsets = [0, 32], sizes = [2, 32], strides = [1, 1]} : vector<2x96xf32> to vector<2x32xf32>
    %65 = arith.mulf %64, %48 : vector<2x32xf32>
    %66 = vector.extract_strided_slice %61 {offsets = [0, 0], sizes = [2, 32], strides = [1, 1]} : vector<2x96xf32> to vector<2x32xf32>
    %67 = arith.mulf %66, %63 : vector<2x32xf32>
    %68 = arith.addf %65, %67 : vector<2x32xf32>
    %69 = vector.extract_strided_slice %61 {offsets = [0, 64], sizes = [2, 32], strides = [1, 1]} : vector<2x96xf32> to vector<2x32xf32>
    %70 = math.tanh %68 : vector<2x32xf32>
    %71 = arith.mulf %69, %70 : vector<2x32xf32>
    %72 = vector.extract_strided_slice %9 {offsets = [0, 3, 0], sizes = [2, 1, 128], strides = [1, 1, 1]} : vector<2x8x128xf32> to vector<2x1x128xf32>
    %73 = vector.shape_cast %72 : vector<2x1x128xf32> to vector<2x128xf32>
    %cst_16 = arith.constant dense<0.000000e+00> : vector<2x128xf32>
    %74 = tpu.matmul %71, %2, %cst_16 {dimension_numbers = #tpu.dot_dimension_numbers<[1], [0], [0], [1], [0, 0, 1, 1], [], []>} : vector<2x32xf32>, vector<32x128xf32>, vector<2x128xf32> -> vector<2x128xf32>
    %75 = arith.addf %73, %74 : vector<2x128xf32>
    %76 = vector.extract_strided_slice %75 {offsets = [0, 0], sizes = [2, 96], strides = [1, 1]} : vector<2x128xf32> to vector<2x96xf32>
    %77 = arith.negf %76 : vector<2x96xf32>
    %78 = math.exp %77 : vector<2x96xf32>
    %cst_17 = arith.constant 1.000000e+00 : f32
    %79 = vector.broadcast %cst_17 : f32 to vector<2x96xf32>
    %80 = arith.addf %79, %78 : vector<2x96xf32>
    %81 = arith.divf %79, %80 : vector<2x96xf32>
    %82 = vector.extract_strided_slice %75 {offsets = [0, 96], sizes = [2, 32], strides = [1, 1]} : vector<2x128xf32> to vector<2x32xf32>
    %83 = math.tanh %82 : vector<2x32xf32>
    %84 = vector.extract_strided_slice %81 {offsets = [0, 32], sizes = [2, 32], strides = [1, 1]} : vector<2x96xf32> to vector<2x32xf32>
    %85 = arith.mulf %84, %68 : vector<2x32xf32>
    %86 = vector.extract_strided_slice %81 {offsets = [0, 0], sizes = [2, 32], strides = [1, 1]} : vector<2x96xf32> to vector<2x32xf32>
    %87 = arith.mulf %86, %83 : vector<2x32xf32>
    %88 = arith.addf %85, %87 : vector<2x32xf32>
    %89 = vector.extract_strided_slice %81 {offsets = [0, 64], sizes = [2, 32], strides = [1, 1]} : vector<2x96xf32> to vector<2x32xf32>
    %90 = math.tanh %88 : vector<2x32xf32>
    %91 = arith.mulf %89, %90 : vector<2x32xf32>
    %92 = vector.extract_strided_slice %9 {offsets = [0, 4, 0], sizes = [2, 1, 128], strides = [1, 1, 1]} : vector<2x8x128xf32> to vector<2x1x128xf32>
    %93 = vector.shape_cast %92 : vector<2x1x128xf32> to vector<2x128xf32>
    %cst_18 = arith.constant dense<0.000000e+00> : vector<2x128xf32>
    %94 = tpu.matmul %91, %2, %cst_18 {dimension_numbers = #tpu.dot_dimension_numbers<[1], [0], [0], [1], [0, 0, 1, 1], [], []>} : vector<2x32xf32>, vector<32x128xf32>, vector<2x128xf32> -> vector<2x128xf32>
    %95 = arith.addf %93, %94 : vector<2x128xf32>
    %96 = vector.extract_strided_slice %95 {offsets = [0, 0], sizes = [2, 96], strides = [1, 1]} : vector<2x128xf32> to vector<2x96xf32>
    %97 = arith.negf %96 : vector<2x96xf32>
    %98 = math.exp %97 : vector<2x96xf32>
    %cst_19 = arith.constant 1.000000e+00 : f32
    %99 = vector.broadcast %cst_19 : f32 to vector<2x96xf32>
    %100 = arith.addf %99, %98 : vector<2x96xf32>
    %101 = arith.divf %99, %100 : vector<2x96xf32>
    %102 = vector.extract_strided_slice %95 {offsets = [0, 96], sizes = [2, 32], strides = [1, 1]} : vector<2x128xf32> to vector<2x32xf32>
    %103 = math.tanh %102 : vector<2x32xf32>
    %104 = vector.extract_strided_slice %101 {offsets = [0, 32], sizes = [2, 32], strides = [1, 1]} : vector<2x96xf32> to vector<2x32xf32>
    %105 = arith.mulf %104, %88 : vector<2x32xf32>
    %106 = vector.extract_strided_slice %101 {offsets = [0, 0], sizes = [2, 32], strides = [1, 1]} : vector<2x96xf32> to vector<2x32xf32>
    %107 = arith.mulf %106, %103 : vector<2x32xf32>
    %108 = arith.addf %105, %107 : vector<2x32xf32>
    %109 = vector.extract_strided_slice %101 {offsets = [0, 64], sizes = [2, 32], strides = [1, 1]} : vector<2x96xf32> to vector<2x32xf32>
    %110 = math.tanh %108 : vector<2x32xf32>
    %111 = arith.mulf %109, %110 : vector<2x32xf32>
    %112 = vector.extract_strided_slice %9 {offsets = [0, 5, 0], sizes = [2, 1, 128], strides = [1, 1, 1]} : vector<2x8x128xf32> to vector<2x1x128xf32>
    %113 = vector.shape_cast %112 : vector<2x1x128xf32> to vector<2x128xf32>
    %cst_20 = arith.constant dense<0.000000e+00> : vector<2x128xf32>
    %114 = tpu.matmul %111, %2, %cst_20 {dimension_numbers = #tpu.dot_dimension_numbers<[1], [0], [0], [1], [0, 0, 1, 1], [], []>} : vector<2x32xf32>, vector<32x128xf32>, vector<2x128xf32> -> vector<2x128xf32>
    %115 = arith.addf %113, %114 : vector<2x128xf32>
    %116 = vector.extract_strided_slice %115 {offsets = [0, 0], sizes = [2, 96], strides = [1, 1]} : vector<2x128xf32> to vector<2x96xf32>
    %117 = arith.negf %116 : vector<2x96xf32>
    %118 = math.exp %117 : vector<2x96xf32>
    %cst_21 = arith.constant 1.000000e+00 : f32
    %119 = vector.broadcast %cst_21 : f32 to vector<2x96xf32>
    %120 = arith.addf %119, %118 : vector<2x96xf32>
    %121 = arith.divf %119, %120 : vector<2x96xf32>
    %122 = vector.extract_strided_slice %115 {offsets = [0, 96], sizes = [2, 32], strides = [1, 1]} : vector<2x128xf32> to vector<2x32xf32>
    %123 = math.tanh %122 : vector<2x32xf32>
    %124 = vector.extract_strided_slice %121 {offsets = [0, 32], sizes = [2, 32], strides = [1, 1]} : vector<2x96xf32> to vector<2x32xf32>
    %125 = arith.mulf %124, %108 : vector<2x32xf32>
    %126 = vector.extract_strided_slice %121 {offsets = [0, 0], sizes = [2, 32], strides = [1, 1]} : vector<2x96xf32> to vector<2x32xf32>
    %127 = arith.mulf %126, %123 : vector<2x32xf32>
    %128 = arith.addf %125, %127 : vector<2x32xf32>
    %129 = vector.extract_strided_slice %121 {offsets = [0, 64], sizes = [2, 32], strides = [1, 1]} : vector<2x96xf32> to vector<2x32xf32>
    %130 = math.tanh %128 : vector<2x32xf32>
    %131 = arith.mulf %129, %130 : vector<2x32xf32>
    %132 = vector.extract_strided_slice %9 {offsets = [0, 6, 0], sizes = [2, 1, 128], strides = [1, 1, 1]} : vector<2x8x128xf32> to vector<2x1x128xf32>
    %133 = vector.shape_cast %132 : vector<2x1x128xf32> to vector<2x128xf32>
    %cst_22 = arith.constant dense<0.000000e+00> : vector<2x128xf32>
    %134 = tpu.matmul %131, %2, %cst_22 {dimension_numbers = #tpu.dot_dimension_numbers<[1], [0], [0], [1], [0, 0, 1, 1], [], []>} : vector<2x32xf32>, vector<32x128xf32>, vector<2x128xf32> -> vector<2x128xf32>
    %135 = arith.addf %133, %134 : vector<2x128xf32>
    %136 = vector.extract_strided_slice %135 {offsets = [0, 0], sizes = [2, 96], strides = [1, 1]} : vector<2x128xf32> to vector<2x96xf32>
    %137 = arith.negf %136 : vector<2x96xf32>
    %138 = math.exp %137 : vector<2x96xf32>
    %cst_23 = arith.constant 1.000000e+00 : f32
    %139 = vector.broadcast %cst_23 : f32 to vector<2x96xf32>
    %140 = arith.addf %139, %138 : vector<2x96xf32>
    %141 = arith.divf %139, %140 : vector<2x96xf32>
    %142 = vector.extract_strided_slice %135 {offsets = [0, 96], sizes = [2, 32], strides = [1, 1]} : vector<2x128xf32> to vector<2x32xf32>
    %143 = math.tanh %142 : vector<2x32xf32>
    %144 = vector.extract_strided_slice %141 {offsets = [0, 32], sizes = [2, 32], strides = [1, 1]} : vector<2x96xf32> to vector<2x32xf32>
    %145 = arith.mulf %144, %128 : vector<2x32xf32>
    %146 = vector.extract_strided_slice %141 {offsets = [0, 0], sizes = [2, 32], strides = [1, 1]} : vector<2x96xf32> to vector<2x32xf32>
    %147 = arith.mulf %146, %143 : vector<2x32xf32>
    %148 = arith.addf %145, %147 : vector<2x32xf32>
    %149 = vector.extract_strided_slice %141 {offsets = [0, 64], sizes = [2, 32], strides = [1, 1]} : vector<2x96xf32> to vector<2x32xf32>
    %150 = math.tanh %148 : vector<2x32xf32>
    %151 = arith.mulf %149, %150 : vector<2x32xf32>
    %152 = vector.extract_strided_slice %9 {offsets = [0, 7, 0], sizes = [2, 1, 128], strides = [1, 1, 1]} : vector<2x8x128xf32> to vector<2x1x128xf32>
    %153 = vector.shape_cast %152 : vector<2x1x128xf32> to vector<2x128xf32>
    %cst_24 = arith.constant dense<0.000000e+00> : vector<2x128xf32>
    %154 = tpu.matmul %151, %2, %cst_24 {dimension_numbers = #tpu.dot_dimension_numbers<[1], [0], [0], [1], [0, 0, 1, 1], [], []>} : vector<2x32xf32>, vector<32x128xf32>, vector<2x128xf32> -> vector<2x128xf32>
    %155 = arith.addf %153, %154 : vector<2x128xf32>
    %156 = vector.extract_strided_slice %155 {offsets = [0, 0], sizes = [2, 96], strides = [1, 1]} : vector<2x128xf32> to vector<2x96xf32>
    %157 = arith.negf %156 : vector<2x96xf32>
    %158 = math.exp %157 : vector<2x96xf32>
    %cst_25 = arith.constant 1.000000e+00 : f32
    %159 = vector.broadcast %cst_25 : f32 to vector<2x96xf32>
    %160 = arith.addf %159, %158 : vector<2x96xf32>
    %161 = arith.divf %159, %160 : vector<2x96xf32>
    %162 = vector.extract_strided_slice %155 {offsets = [0, 96], sizes = [2, 32], strides = [1, 1]} : vector<2x128xf32> to vector<2x32xf32>
    %163 = math.tanh %162 : vector<2x32xf32>
    %164 = vector.extract_strided_slice %161 {offsets = [0, 32], sizes = [2, 32], strides = [1, 1]} : vector<2x96xf32> to vector<2x32xf32>
    %165 = arith.mulf %164, %148 : vector<2x32xf32>
    %166 = vector.extract_strided_slice %161 {offsets = [0, 0], sizes = [2, 32], strides = [1, 1]} : vector<2x96xf32> to vector<2x32xf32>
    %167 = arith.mulf %166, %163 : vector<2x32xf32>
    %168 = arith.addf %165, %167 : vector<2x32xf32>
    %169 = vector.extract_strided_slice %161 {offsets = [0, 64], sizes = [2, 32], strides = [1, 1]} : vector<2x96xf32> to vector<2x32xf32>
    %170 = math.tanh %168 : vector<2x32xf32>
    %171 = arith.mulf %169, %170 : vector<2x32xf32>
    %172 = vector.extract_strided_slice %0 {offsets = [0, 7, 15], sizes = [2, 1, 15], strides = [1, 1, 1]} : vector<2x8x30xf32> to vector<2x1x15xf32>
    %173 = vector.shape_cast %172 : vector<2x1x15xf32> to vector<2x15xf32>
    %174 = math.cos %173 : vector<2x15xf32>
    %175 = math.sin %173 : vector<2x15xf32>
    %176 = tpu.concatenate %174, %175 in 1 : vector<2x15xf32>, vector<2x15xf32> -> vector<2x30xf32>
    %c0_26 = arith.constant 0 : index
    %c0_27 = arith.constant 0 : index
    %177 = vector.load %arg4[%c0_26, %c0_27] : memref<32x60xf32, #tpu.memory_space<vmem>>, vector<32x60xf32>
    %cst_28 = arith.constant dense<0.000000e+00> : vector<2x60xf32>
    %178 = tpu.matmul %171, %177, %cst_28 {dimension_numbers = #tpu.dot_dimension_numbers<[1], [0], [0], [1], [0, 0, 1, 1], [], []>} : vector<2x32xf32>, vector<32x60xf32>, vector<2x60xf32> -> vector<2x60xf32>
    %179 = vector.extract_strided_slice %178 {offsets = [0, 0], sizes = [2, 30], strides = [1, 1]} : vector<2x60xf32> to vector<2x30xf32>
    %cst_29 = arith.constant dense<0.000000e+00> : vector<2x2xf32>
    %180 = tpu.matmul %179, %176, %cst_29 {dimension_numbers = #tpu.dot_dimension_numbers<[1], [1], [0], [0], [0, 0, 1, 0], [], []>} : vector<2x30xf32>, vector<2x30xf32>, vector<2x2xf32> -> vector<2x2xf32>
    %181 = vector.extract_strided_slice %178 {offsets = [0, 30], sizes = [2, 30], strides = [1, 1]} : vector<2x60xf32> to vector<2x30xf32>
    %cst_30 = arith.constant dense<0.000000e+00> : vector<2x2xf32>
    %182 = tpu.matmul %181, %176, %cst_30 {dimension_numbers = #tpu.dot_dimension_numbers<[1], [1], [0], [0], [0, 0, 1, 0], [], []>} : vector<2x30xf32>, vector<2x30xf32>, vector<2x2xf32> -> vector<2x2xf32>
    %c0_31 = arith.constant 0 : index
    %c0_32 = arith.constant 0 : index
    %183 = vector.load %arg5[%c0_31, %c0_32] : memref<2x4xf32, #tpu.memory_space<vmem>>, vector<2x2xf32>
    tpu.vector_store %arg5[%c0_31, %c0_32], %180 {strides = array<i32>} : memref<2x4xf32, #tpu.memory_space<vmem>>, vector<2x2xf32>,
    %c0_33 = arith.constant 0 : index
    %c2 = arith.constant 2 : index
    %184 = vector.load %arg5[%c0_33, %c2] : memref<2x4xf32, #tpu.memory_space<vmem>>, vector<2x2xf32>
    tpu.vector_store %arg5[%c0_33, %c2], %182 {strides = array<i32>} : memref<2x4xf32, #tpu.memory_space<vmem>>, vector<2x2xf32>,
    return
  }
}

</mosaic_0001>

<llo_original>
// kernel: vdlstm_forward.1
$region0: #{vdlstm_forward.1}
  #allocation0 [shape = 'u32[]', space=smem, size = 0x4, offset = 0x4, fixed_abs, tag = 'smem constant byte address 0x4 - core index']
  #allocation1 [shape = 'u32[144,128]{1,0:T(1,128)}', space=vmem, size = 0x12000, scoped, tag = 'internal scratch']
  %s0 = inlined_call_operand.hbm [shape: f32[2,8,30], index: 0, kind: input, shape index: {}]
  %s1 = inlined_call_operand.hbm [shape: f32[15,128], index: 1, kind: input, shape index: {}]
  %s2 = inlined_call_operand.hbm [shape: f32[32,128], index: 2, kind: input, shape index: {}]
  %s3 = inlined_call_operand.vmem [shape: f32[1,128], index: 3, kind: input, shape index: {}]
  %s4 = inlined_call_operand.hbm [shape: f32[32,60], index: 4, kind: input, shape index: {}]
  %s5 = inlined_call_operand.hbm [shape: f32[2,4], index: 5, kind: output, shape index: {}]
  %s6 = sld [smem:[#allocation0]]
  $region46: #{vdlstm_forward.1} parent=0
    _
  %s8 = ssub.s32 1, %s6
  %s9 = scalar_select 0, %s8, %s6
  $region1: #{vdlstm_forward.1} parent=0
    #allocation2 [shape = 'u8[8192]{0}', space=vmem, size = 0x2000, scoped, tag = 'input window, operand 0, single buffered']
    #allocation3 [shape = 's32[1]{0}', space=sflag, size = 0x4, scoped, tag = 'scoped memory for vdlstm_forward.1']
    #allocation4 [shape = 's32[1]{0}', space=sflag, size = 0x4, scoped, tag = 'scoped memory for vdlstm_forward.1']
    #allocation5 [shape = 'u8[8192]{0}', space=vmem, size = 0x2000, scoped, tag = 'input window, operand 1, single buffered']
    #allocation6 [shape = 's32[1]{0}', space=sflag, size = 0x4, scoped, tag = 'scoped memory for vdlstm_forward.1']
    #allocation7 [shape = 'u8[16384]{0}', space=vmem, size = 0x4000, scoped, tag = 'input window, operand 2, single buffered']
    #allocation8 [shape = 'u8[16384]{0}', space=vmem, size = 0x4000, scoped, tag = 'input window, operand 4, single buffered']
    #allocation9 [shape = 's32[1]{0}', space=sflag, size = 0x4, scoped, tag = 'scoped memory for vdlstm_forward.1']
    #allocation10 [shape = 'u8[1024]{0}', space=vmem, size = 0x400, scoped, tag = 'output window, operand 0, single buffered']
    %10 = vsyncpa [#allocation3], 0
    %11 = vsyncpa [#allocation6], 0
    %12 = vsyncpa [#allocation9], 0
    %13 = vsyncpa [#allocation4], 0
    // Predicated region
    $region2: #{vdlstm_forward.1} parent=1 // pred_check
      _
    $region3: #{vdlstm_forward.1} parent=1 // pred_check_branch
      %15 = sbr.rel (0) target = $region5
    $region4: #{vdlstm_forward.1} parent=1 // pred_region
      %s17 = ssub.s32 256, 256
      %18 = vsyncadd [#allocation3], %s17
      %s19 = sshll.u32 [#allocation2], 4
      %s20 = int_to_ptr.vmem [resolvable:$true] %s19
      %25 = dma.hbm_to_vmem [thread:$0]  %s0, 256, %s20, [#allocation3], 128, 128, 8
    $region5: #{vdlstm_forward.1} parent=1 // pred_fallthru
      _
    // Predicated region
    $region6: #{vdlstm_forward.1} parent=1 // pred_check
      _
    $region7: #{vdlstm_forward.1} parent=1 // pred_check_branch
      %27 = sbr.rel (0) target = $region9
    $region8: #{vdlstm_forward.1} parent=1 // pred_region
      %s29 = ssub.s32 256, 256
      %30 = vsyncadd [#allocation6], %s29
      %s31 = sshll.u32 [#allocation5], 4
      %s32 = int_to_ptr.vmem [resolvable:$true] %s31
      %37 = dma.hbm_to_vmem [thread:$0]  %s1, 256, %s32, [#allocation6], 128, 128, 8
    $region9: #{vdlstm_forward.1} parent=1 // pred_fallthru
      _
    // Predicated region
    $region10: #{vdlstm_forward.1} parent=1 // pred_check
      _
    $region11: #{vdlstm_forward.1} parent=1 // pred_check_branch
      %39 = sbr.rel (0) target = $region13
    $region12: #{vdlstm_forward.1} parent=1 // pred_region
      %s41 = ssub.s32 512, 512
      %42 = vsyncadd [#allocation6], %s41
      %s43 = sshll.u32 [#allocation7], 4
      %s44 = int_to_ptr.vmem [resolvable:$true] %s43
      %49 = dma.hbm_to_vmem [thread:$0]  %s2, 512, %s44, [#allocation6], 128, 128, 8
    $region13: #{vdlstm_forward.1} parent=1 // pred_fallthru
      _
    // Predicated region
    $region14: #{vdlstm_forward.1} parent=1 // pred_check
      _
    $region15: #{vdlstm_forward.1} parent=1 // pred_check_branch
      %51 = sbr.rel (0) target = $region17
    $region16: #{vdlstm_forward.1} parent=1 // pred_region
      _
    $region17: #{vdlstm_forward.1} parent=1 // pred_fallthru
      _
    // Predicated region
    $region18: #{vdlstm_forward.1} parent=1 // pred_check
      _
    $region19: #{vdlstm_forward.1} parent=1 // pred_check_branch
      %53 = sbr.rel (0) target = $region21
    $region20: #{vdlstm_forward.1} parent=1 // pred_region
      %s55 = ssub.s32 512, 512
      %56 = vsyncadd [#allocation9], %s55
      %s57 = sshll.u32 [#allocation8], 4
      %s58 = int_to_ptr.vmem [resolvable:$true] %s57
      %63 = dma.hbm_to_vmem [thread:$0]  %s4, 512, %s58, [#allocation9], 128, 128, 8
    $region21: #{vdlstm_forward.1} parent=1 // pred_fallthru
      _
    // Predicated region
    $region22: #{vdlstm_forward.1} parent=1 // pred_check
      _
    $region23: #{vdlstm_forward.1} parent=1 // pred_check_branch
      %65 = sbr.rel (0) target = $region25
    $region24: #{vdlstm_forward.1} parent=1 // pred_region
      %66 = dma.done [#allocation3], 256
    $region25: #{vdlstm_forward.1} parent=1 // pred_fallthru
      _
    // Predicated region
    $region26: #{vdlstm_forward.1} parent=1 // pred_check
      _
    $region27: #{vdlstm_forward.1} parent=1 // pred_check_branch
      %68 = sbr.rel (0) target = $region29
    $region28: #{vdlstm_forward.1} parent=1 // pred_region
      %69 = dma.done [#allocation6], 256
    $region29: #{vdlstm_forward.1} parent=1 // pred_fallthru
      _
    // Predicated region
    $region30: #{vdlstm_forward.1} parent=1 // pred_check
      _
    $region31: #{vdlstm_forward.1} parent=1 // pred_check_branch
      %71 = sbr.rel (0) target = $region33
    $region32: #{vdlstm_forward.1} parent=1 // pred_region
      %72 = dma.done [#allocation6], 512
    $region33: #{vdlstm_forward.1} parent=1 // pred_fallthru
      _
    // Predicated region
    $region34: #{vdlstm_forward.1} parent=1 // pred_check
      _
    $region35: #{vdlstm_forward.1} parent=1 // pred_check_branch
      %74 = sbr.rel (0) target = $region37
    $region36: #{vdlstm_forward.1} parent=1 // pred_region
      %75 = dma.done [#allocation9], 512
    $region37: #{vdlstm_forward.1} parent=1 // pred_fallthru
      _
    %v76 = vld [vmem:[#allocation2] sm:$0xff]
    %v77 = vld [vmem:[#allocation2 + $0x8] sm:$0xff]
    %v78 = vld [vmem:[#allocation5] sm:$0xff]
    %v79 = vld [vmem:[#allocation5 + $0x8] sm:$0x7f]
    %v80 = vld [vmem:[#allocation7] sm:$0xff]
    %v81 = vld [vmem:[#allocation7 + $0x8] sm:$0xff]
    %v82 = vld [vmem:[#allocation7 + $0x10] sm:$0xff]
    %v83 = vld [vmem:[#allocation7 + $0x18] sm:$0xff]
    %v84 = vld [vmem:[%s3] sm:$0x1]
    %v86 = vlaneseq
    %v87 = vshrl.u32 %v86, 7
    %v88 = vsub.s32 0, %v87
    %v89 = vrot.slane %v84, %v88
    %vm91 = vcmask 121856
    %v93 = vsel %vm91, %v76, 0
    %v96 = vsel %vm91, %v77, 0
    %vm98 = vcmask 1046528
    %v100 = vsel %vm98, %v79, 0
    %102 = vmatprep.subr.mxu0 0.0
    %103 = vmatpush1.msra.mxu0 %v78
    %104 = vmatprep.subr.mxu0 0.0
    %105 = vmatpush1.msra.mxu0 %v100
    %106 = vmatprep.subr.mxu0 0.0
    %107 = vmatpush1.msra.mxu0 0.0
    %108 = vmatprep.subr.mxu0 0.0
    %109 = vmatpush1.msra.mxu0 0.0
    %110 = vmatprep.subr.mxu0 0.0
    %111 = vmatpush1.msra.mxu0 0.0
    %112 = vmatprep.subr.mxu0 0.0
    %113 = vmatpush1.msra.mxu0 0.0
    %114 = vmatprep.subr.mxu0 0.0
    %115 = vmatpush1.msra.mxu0 0.0
    %116 = vmatprep.subr.mxu0 0.0
    %117 = vmatpush1.msra.mxu0 0.0
    %118 = vmatprep.subr.mxu0 0.0
    %119 = vmatpush1.msra.mxu0 0.0
    %120 = vmatprep.subr.mxu0 0.0
    %121 = vmatpush1.msra.mxu0 0.0
    %122 = vmatprep.subr.mxu0 0.0
    %123 = vmatpush1.msra.mxu0 0.0
    %124 = vmatprep.subr.mxu0 0.0
    %125 = vmatpush1.msra.mxu0 0.0
    %126 = vmatprep.subr.mxu0 0.0
    %127 = vmatpush1.msra.mxu0 0.0
    %128 = vmatprep.subr.mxu0 0.0
    %129 = vmatpush1.msra.mxu0 0.0
    %130 = vmatprep.subr.mxu0 0.0
    %131 = vmatpush1.msra.mxu0 0.0
    %132 = vmatprep.subr.mxu0 0.0
    %133 = vmatpush1.msra.mxu0 0.0
    %134 = vmatprep.subr.mxu0 0.0
    %135 = vmatpush1.msra.mxu0 0.0
    %136 = vmatprep.subr.mxu0 0.0
    %137 = vmatpush1.msra.mxu0 0.0
    %138 = vmatprep.subr.mxu0 0.0
    %139 = vmatpush1.msra.mxu0 0.0
    %140 = vmatprep.subr.mxu0 0.0
    %141 = vmatpush1.msra.mxu0 0.0
    %142 = vmatprep.subr.mxu0 0.0
    %143 = vmatpush1.msra.mxu0 0.0
    %144 = vmatprep.subr.mxu0 0.0
    %145 = vmatpush1.msra.mxu0 0.0
    %146 = vmatprep.subr.mxu0 0.0
    %147 = vmatpush1.msra.mxu0 0.0
    %148 = vmatprep.subr.mxu0 0.0
    %149 = vmatpush1.msra.mxu0 0.0
    %150 = vmatprep.subr.mxu0 0.0
    %151 = vmatpush1.msra.mxu0 0.0
    %152 = vmatprep.subr.mxu0 0.0
    %153 = vmatpush1.msra.mxu0 0.0
    %154 = vmatprep.subr.mxu0 0.0
    %155 = vmatpush1.msra.mxu0 0.0
    %156 = vmatprep.subr.mxu0 0.0
    %157 = vmatpush1.msra.mxu0 0.0
    %158 = vmatprep.subr.mxu0 0.0
    %159 = vmatpush1.msra.mxu0 0.0
    %160 = vmatprep.subr.mxu0 0.0
    %161 = vmatpush1.msra.mxu0 0.0
    %162 = vmatprep.subr.mxu0 0.0
    %163 = vmatpush1.msra.mxu0 0.0
    %164 = vmatprep.subr.mxu0 0.0
    %165 = vmatpush1.msra.mxu0 0.0
    %166 = vmatprep.mubr.f32.mxu0 0.0
    %167 = vmatmul.mubr.f32.gmra.mrb[0].mxu0 %v93
    %v168 = vpop.f32.mrb[0].mxu0
    %v169 = vadd.f32 %v89, %v168
    %v170 = vpop.f32.mrb[0].mxu0
    %171 = vmatprep.mubr.f32.mxu0 0.0
    %172 = vmatmul.mubr.f32.gmra.mrb[0].mxu0 %v96
    %v173 = vpop.f32.mrb[0].mxu0
    %v174 = vadd.f32 %v89, %v173
    %v175 = vpop.f32.mrb[0].mxu0
    %176 = vdwg.mxu0
    %vm177 = vcmask 261120
    %v179 = vsel %vm177, 0.0, 0
    %181 = vmatprep.subr.mxu0 0.0
    %182 = vmatpush1.msra.mxu0 %v80
    %183 = vmatprep.subr.mxu0 0.0
    %184 = vmatpush1.msra.mxu0 %v81
    %185 = vmatprep.subr.mxu0 0.0
    %186 = vmatpush1.msra.mxu0 %v82
    %187 = vmatprep.subr.mxu0 0.0
    %188 = vmatpush1.msra.mxu0 %v83
    %189 = vmatprep.subr.mxu0 0.0
    %190 = vmatpush1.msra.mxu0 0.0
    %191 = vmatprep.subr.mxu0 0.0
    %192 = vmatpush1.msra.mxu0 0.0
    %193 = vmatprep.subr.mxu0 0.0
    %194 = vmatpush1.msra.mxu0 0.0
    %195 = vmatprep.subr.mxu0 0.0
    %196 = vmatpush1.msra.mxu0 0.0
    %197 = vmatprep.subr.mxu0 0.0
    %198 = vmatpush1.msra.mxu0 0.0
    %199 = vmatprep.subr.mxu0 0.0
    %200 = vmatpush1.msra.mxu0 0.0
    %201 = vmatprep.subr.mxu0 0.0
    %202 = vmatpush1.msra.mxu0 0.0
    %203 = vmatprep.subr.mxu0 0.0
    %204 = vmatpush1.msra.mxu0 0.0
    %205 = vmatprep.subr.mxu0 0.0
    %206 = vmatpush1.msra.mxu0 0.0
    %207 = vmatprep.subr.mxu0 0.0
    %208 = vmatpush1.msra.mxu0 0.0
    %209 = vmatprep.subr.mxu0 0.0
    %210 = vmatpush1.msra.mxu0 0.0
    %211 = vmatprep.subr.mxu0 0.0
    %212 = vmatpush1.msra.mxu0 0.0
    %213 = vmatprep.subr.mxu0 0.0
    %214 = vmatpush1.msra.mxu0 0.0
    %215 = vmatprep.subr.mxu0 0.0
    %216 = vmatpush1.msra.mxu0 0.0
    %217 = vmatprep.subr.mxu0 0.0
    %218 = vmatpush1.msra.mxu0 0.0
    %219 = vmatprep.subr.mxu0 0.0
    %220 = vmatpush1.msra.mxu0 0.0
    %221 = vmatprep.subr.mxu0 0.0
    %222 = vmatpush1.msra.mxu0 0.0
    %223 = vmatprep.subr.mxu0 0.0
    %224 = vmatpush1.msra.mxu0 0.0
    %225 = vmatprep.subr.mxu0 0.0
    %226 = vmatpush1.msra.mxu0 0.0
    %227 = vmatprep.subr.mxu0 0.0
    %228 = vmatpush1.msra.mxu0 0.0
    %229 = vmatprep.subr.mxu0 0.0
    %230 = vmatpush1.msra.mxu0 0.0
    %231 = vmatprep.subr.mxu0 0.0
    %232 = vmatpush1.msra.mxu0 0.0
    %233 = vmatprep.subr.mxu0 0.0
    %234 = vmatpush1.msra.mxu0 0.0
    %235 = vmatprep.subr.mxu0 0.0
    %236 = vmatpush1.msra.mxu0 0.0
    %237 = vmatprep.subr.mxu0 0.0
    %238 = vmatpush1.msra.mxu0 0.0
    %239 = vmatprep.subr.mxu0 0.0
    %240 = vmatpush1.msra.mxu0 0.0
    %241 = vmatprep.subr.mxu0 0.0
    %242 = vmatpush1.msra.mxu0 0.0
    %243 = vmatprep.subr.mxu0 0.0
    %244 = vmatpush1.msra.mxu0 0.0
    %245 = vmatprep.mubr.f32.mxu0 0.0
    %246 = vmatmul.mubr.f32.gmra.mrb[0].mxu0 %v179
    %v247 = vpop.f32.mrb[0].mxu0
    %v248 = vadd.f32 0.0, %v247
    %v249 = vpop.f32.mrb[0].mxu0
    %250 = vdwg.mxu0
    %v252 = vrot.slane %v248, 1
    %v255 = vadd.f32 %v169, %v248
    %v256 = vadd.f32 %v174, %v252
    %v257 = vxor.u32 %v255, 2147483648
    %v258 = vxor.u32 %v256, 2147483648
    %v259 = vmul.f32 %v257, 1.442695
    %v260 = vpow.pop %v259
    %v261 = vmul.f32 %v258, 1.442695
    %v262 = vpow.pop %v261
    %v263 = vadd.f32 %v260, 1.0
    %v264 = vadd.f32 %v262, 1.0
    %v265 = vrcp.pop %v263
    %v266 = vmul.f32 1.0, %v265
    %v267 = vrcp.pop %v264
    %v268 = vmul.f32 1.0, %v267
    %v269 = vtanh.pop %v255
    %v270 = vtanh.pop %v256
    %v271 = vmul.f32 %v266, 0.0
    %v272 = vmul.f32 %v268, 0.0
    %275 = vrot.lane.b32.xlu0 %v269, 32
    %v276 = vpop.permute.xlu0 %275
    %277 = vrot.lane.b32.xlu0 %v270, 32
    %v278 = vpop.permute.xlu0 %277
    %v281 = vmul.f32 %v266, %v276
    %v282 = vmul.f32 %v268, %v278
    %285 = vrot.lane.b32.xlu0 %v281, 32
    %v286 = vpop.permute.xlu0 %285
    %287 = vrot.lane.b32.xlu0 %v282, 32
    %v288 = vpop.permute.xlu0 %287
    %v291 = vadd.f32 %v271, %v286
    %v292 = vadd.f32 %v272, %v288
    %v293 = vtanh.pop %v291
    %v294 = vtanh.pop %v292
    %297 = vrot.lane.b32.xlu0 %v293, 32
    %v298 = vpop.permute.xlu0 %297
    %299 = vrot.lane.b32.xlu0 %v294, 32
    %v300 = vpop.permute.xlu0 %299
    %v303 = vmul.f32 %v266, %v298
    %v304 = vmul.f32 %v268, %v300
    %v307 = vrot.slane %v304, 7
    %vm308 = vcmask 1041409
    %v309 = vsel %vm308, %v307, %v303
    %310 = vrot.lane.b32.xlu0 %v309, 64
    %v311 = vpop.permute.xlu0 %310
    %v312 = vsel %vm177, %v311, 0
    %314 = vmatprep.subr.mxu0 0.0
    %315 = vmatpush1.msra.mxu0 %v80
    %316 = vmatprep.subr.mxu0 0.0
    %317 = vmatpush1.msra.mxu0 %v81
    %318 = vmatprep.subr.mxu0 0.0
    %319 = vmatpush1.msra.mxu0 %v82
    %320 = vmatprep.subr.mxu0 0.0
    %321 = vmatpush1.msra.mxu0 %v83
    %322 = vmatprep.subr.mxu0 0.0
    %323 = vmatpush1.msra.mxu0 0.0
    %324 = vmatprep.subr.mxu0 0.0
    %325 = vmatpush1.msra.mxu0 0.0
    %326 = vmatprep.subr.mxu0 0.0
    %327 = vmatpush1.msra.mxu0 0.0
    %328 = vmatprep.subr.mxu0 0.0
    %329 = vmatpush1.msra.mxu0 0.0
    %330 = vmatprep.subr.mxu0 0.0
    %331 = vmatpush1.msra.mxu0 0.0
    %332 = vmatprep.subr.mxu0 0.0
    %333 = vmatpush1.msra.mxu0 0.0
    %334 = vmatprep.subr.mxu0 0.0
    %335 = vmatpush1.msra.mxu0 0.0
    %336 = vmatprep.subr.mxu0 0.0
    %337 = vmatpush1.msra.mxu0 0.0
    %338 = vmatprep.subr.mxu0 0.0
    %339 = vmatpush1.msra.mxu0 0.0
    %340 = vmatprep.subr.mxu0 0.0
    %341 = vmatpush1.msra.mxu0 0.0
    %342 = vmatprep.subr.mxu0 0.0
    %343 = vmatpush1.msra.mxu0 0.0
    %344 = vmatprep.subr.mxu0 0.0
    %345 = vmatpush1.msra.mxu0 0.0
    %346 = vmatprep.subr.mxu0 0.0
    %347 = vmatpush1.msra.mxu0 0.0
    %348 = vmatprep.subr.mxu0 0.0
    %349 = vmatpush1.msra.mxu0 0.0
    %350 = vmatprep.subr.mxu0 0.0
    %351 = vmatpush1.msra.mxu0 0.0
    %352 = vmatprep.subr.mxu0 0.0
    %353 = vmatpush1.msra.mxu0 0.0
    %354 = vmatprep.subr.mxu0 0.0
    %355 = vmatpush1.msra.mxu0 0.0
    %356 = vmatprep.subr.mxu0 0.0
    %357 = vmatpush1.msra.mxu0 0.0
    %358 = vmatprep.subr.mxu0 0.0
    %359 = vmatpush1.msra.mxu0 0.0
    %360 = vmatprep.subr.mxu0 0.0
    %361 = vmatpush1.msra.mxu0 0.0
    %362 = vmatprep.subr.mxu0 0.0
    %363 = vmatpush1.msra.mxu0 0.0
    %364 = vmatprep.subr.mxu0 0.0
    %365 = vmatpush1.msra.mxu0 0.0
    %366 = vmatprep.subr.mxu0 0.0
    %367 = vmatpush1.msra.mxu0 0.0
    %368 = vmatprep.subr.mxu0 0.0
    %369 = vmatpush1.msra.mxu0 0.0
    %370 = vmatprep.subr.mxu0 0.0
    %371 = vmatpush1.msra.mxu0 0.0
    %372 = vmatprep.subr.mxu0 0.0
    %373 = vmatpush1.msra.mxu0 0.0
    %374 = vmatprep.subr.mxu0 0.0
    %375 = vmatpush1.msra.mxu0 0.0
    %376 = vmatprep.subr.mxu0 0.0
    %377 = vmatpush1.msra.mxu0 0.0
    %378 = vmatprep.mubr.f32.mxu0 0.0
    %379 = vmatmul.mubr.f32.gmra.mrb[0].mxu0 %v312
    %v380 = vpop.f32.mrb[0].mxu0
    %v381 = vadd.f32 0.0, %v380
    %v382 = vpop.f32.mrb[0].mxu0
    %383 = vdwg.mxu0
    %v385 = vrot.slane %v381, 7
    %v388 = vadd.f32 %v169, %v385
    %v389 = vadd.f32 %v174, %v381
    %v390 = vxor.u32 %v388, 2147483648
    %v391 = vxor.u32 %v389, 2147483648
    %v392 = vmul.f32 %v390, 1.442695
    %v393 = vpow.pop %v392
    %v394 = vmul.f32 %v391, 1.442695
    %v395 = vpow.pop %v394
    %v396 = vadd.f32 %v393, 1.0
    %v397 = vadd.f32 %v395, 1.0
    %v398 = vrcp.pop %v396
    %v399 = vmul.f32 1.0, %v398
    %v400 = vrcp.pop %v397
    %v401 = vmul.f32 1.0, %v400
    %v402 = vtanh.pop %v388
    %v403 = vtanh.pop %v389
    %v406 = vrot.slane %v291, 7
    %v407 = vrot.slane %v292, 7
    %v410 = vmul.f32 %v399, %v406
    %v411 = vmul.f32 %v401, %v407
    %414 = vrot.lane.b32.xlu0 %v402, 32
    %v415 = vpop.permute.xlu0 %414
    %416 = vrot.lane.b32.xlu0 %v403, 32
    %v417 = vpop.permute.xlu0 %416
    %v420 = vmul.f32 %v399, %v415
    %v421 = vmul.f32 %v401, %v417
    %424 = vrot.lane.b32.xlu0 %v420, 32
    %v425 = vpop.permute.xlu0 %424
    %426 = vrot.lane.b32.xlu0 %v421, 32
    %v427 = vpop.permute.xlu0 %426
    %v430 = vadd.f32 %v410, %v425
    %v431 = vadd.f32 %v411, %v427
    %v432 = vtanh.pop %v430
    %v433 = vtanh.pop %v431
    %436 = vrot.lane.b32.xlu0 %v432, 32
    %v437 = vpop.permute.xlu0 %436
    %438 = vrot.lane.b32.xlu0 %v433, 32
    %v439 = vpop.permute.xlu0 %438
    %v442 = vmul.f32 %v399, %v437
    %v443 = vmul.f32 %v401, %v439
    %v446 = vrot.slane %v442, 1
    %v447 = vsel %vm308, %v443, %v446
    %448 = vrot.lane.b32.xlu0 %v447, 64
    %v449 = vpop.permute.xlu0 %448
    %v450 = vsel %vm177, %v449, 0
    %452 = vmatprep.subr.mxu0 0.0
    %453 = vmatpush1.msra.mxu0 %v80
    %454 = vmatprep.subr.mxu0 0.0
    %455 = vmatpush1.msra.mxu0 %v81
    %456 = vmatprep.subr.mxu0 0.0
    %457 = vmatpush1.msra.mxu0 %v82
    %458 = vmatprep.subr.mxu0 0.0
    %459 = vmatpush1.msra.mxu0 %v83
    %460 = vmatprep.subr.mxu0 0.0
    %461 = vmatpush1.msra.mxu0 0.0
    %462 = vmatprep.subr.mxu0 0.0
    %463 = vmatpush1.msra.mxu0 0.0
    %464 = vmatprep.subr.mxu0 0.0
    %465 = vmatpush1.msra.mxu0 0.0
    %466 = vmatprep.subr.mxu0 0.0
    %467 = vmatpush1.msra.mxu0 0.0
    %468 = vmatprep.subr.mxu0 0.0
    %469 = vmatpush1.msra.mxu0 0.0
    %470 = vmatprep.subr.mxu0 0.0
    %471 = vmatpush1.msra.mxu0 0.0
    %472 = vmatprep.subr.mxu0 0.0
    %473 = vmatpush1.msra.mxu0 0.0
    %474 = vmatprep.subr.mxu0 0.0
    %475 = vmatpush1.msra.mxu0 0.0
    %476 = vmatprep.subr.mxu0 0.0
    %477 = vmatpush1.msra.mxu0 0.0
    %478 = vmatprep.subr.mxu0 0.0
    %479 = vmatpush1.msra.mxu0 0.0
    %480 = vmatprep.subr.mxu0 0.0
    %481 = vmatpush1.msra.mxu0 0.0
    %482 = vmatprep.subr.mxu0 0.0
    %483 = vmatpush1.msra.mxu0 0.0
    %484 = vmatprep.subr.mxu0 0.0
    %485 = vmatpush1.msra.mxu0 0.0
    %486 = vmatprep.subr.mxu0 0.0
    %487 = vmatpush1.msra.mxu0 0.0
    %488 = vmatprep.subr.mxu0 0.0
    %489 = vmatpush1.msra.mxu0 0.0
    %490 = vmatprep.subr.mxu0 0.0
    %491 = vmatpush1.msra.mxu0 0.0
    %492 = vmatprep.subr.mxu0 0.0
    %493 = vmatpush1.msra.mxu0 0.0
    %494 = vmatprep.subr.mxu0 0.0
    %495 = vmatpush1.msra.mxu0 0.0
    %496 = vmatprep.subr.mxu0 0.0
    %497 = vmatpush1.msra.mxu0 0.0
    %498 = vmatprep.subr.mxu0 0.0
    %499 = vmatpush1.msra.mxu0 0.0
    %500 = vmatprep.subr.mxu0 0.0
    %501 = vmatpush1.msra.mxu0 0.0
    %502 = vmatprep.subr.mxu0 0.0
    %503 = vmatpush1.msra.mxu0 0.0
    %504 = vmatprep.subr.mxu0 0.0
    %505 = vmatpush1.msra.mxu0 0.0
    %506 = vmatprep.subr.mxu0 0.0
    %507 = vmatpush1.msra.mxu0 0.0
    %508 = vmatprep.subr.mxu0 0.0
    %509 = vmatpush1.msra.mxu0 0.0
    %510 = vmatprep.subr.mxu0 0.0
    %511 = vmatpush1.msra.mxu0 0.0
    %512 = vmatprep.subr.mxu0 0.0
    %513 = vmatpush1.msra.mxu0 0.0
    %514 = vmatprep.subr.mxu0 0.0
    %515 = vmatpush1.msra.mxu0 0.0
    %516 = vmatprep.mubr.f32.mxu0 0.0
    %517 = vmatmul.mubr.f32.gmra.mrb[0].mxu0 %v450
    %v518 = vpop.f32.mrb[0].mxu0
    %v519 = vadd.f32 0.0, %v518
    %v520 = vpop.f32.mrb[0].mxu0
    %521 = vdwg.mxu0
    %v523 = vrot.slane %v519, 6
    %v524 = vrot.slane %v519, 7
    %v527 = vadd.f32 %v169, %v523
    %v528 = vadd.f32 %v174, %v524
    %v529 = vxor.u32 %v527, 2147483648
    %v530 = vxor.u32 %v528, 2147483648
    %v531 = vmul.f32 %v529, 1.442695
    %v532 = vpow.pop %v531
    %v533 = vmul.f32 %v530, 1.442695
    %v534 = vpow.pop %v533
    %v535 = vadd.f32 %v532, 1.0
    %v536 = vadd.f32 %v534, 1.0
    %v537 = vrcp.pop %v535
    %v538 = vmul.f32 1.0, %v537
    %v539 = vrcp.pop %v536
    %v540 = vmul.f32 1.0, %v539
    %v541 = vtanh.pop %v527
    %v542 = vtanh.pop %v528
    %v545 = vrot.slane %v430, 7
    %v546 = vrot.slane %v431, 7
    %v549 = vmul.f32 %v538, %v545
    %v550 = vmul.f32 %v540, %v546
    %553 = vrot.lane.b32.xlu0 %v541, 32
    %v554 = vpop.permute.xlu0 %553
    %555 = vrot.lane.b32.xlu0 %v542, 32
    %v556 = vpop.permute.xlu0 %555
    %v559 = vmul.f32 %v538, %v554
    %v560 = vmul.f32 %v540, %v556
    %563 = vrot.lane.b32.xlu0 %v559, 32
    %v564 = vpop.permute.xlu0 %563
    %565 = vrot.lane.b32.xlu0 %v560, 32
    %v566 = vpop.permute.xlu0 %565
    %v569 = vadd.f32 %v549, %v564
    %v570 = vadd.f32 %v550, %v566
    %v571 = vtanh.pop %v569
    %v572 = vtanh.pop %v570
    %575 = vrot.lane.b32.xlu0 %v571, 32
    %v576 = vpop.permute.xlu0 %575
    %577 = vrot.lane.b32.xlu0 %v572, 32
    %v578 = vpop.permute.xlu0 %577
    %v581 = vmul.f32 %v538, %v576
    %v582 = vmul.f32 %v540, %v578
    %v585 = vrot.slane %v581, 2
    %v586 = vrot.slane %v582, 1
    %v587 = vsel %vm308, %v586, %v585
    %588 = vrot.lane.b32.xlu0 %v587, 64
    %v589 = vpop.permute.xlu0 %588
    %v590 = vsel %vm177, %v589, 0
    %592 = vmatprep.subr.mxu0 0.0
    %593 = vmatpush1.msra.mxu0 %v80
    %594 = vmatprep.subr.mxu0 0.0
    %595 = vmatpush1.msra.mxu0 %v81
    %596 = vmatprep.subr.mxu0 0.0
    %597 = vmatpush1.msra.mxu0 %v82
    %598 = vmatprep.subr.mxu0 0.0
    %599 = vmatpush1.msra.mxu0 %v83
    %600 = vmatprep.subr.mxu0 0.0
    %601 = vmatpush1.msra.mxu0 0.0
    %602 = vmatprep.subr.mxu0 0.0
    %603 = vmatpush1.msra.mxu0 0.0
    %604 = vmatprep.subr.mxu0 0.0
    %605 = vmatpush1.msra.mxu0 0.0
    %606 = vmatprep.subr.mxu0 0.0
    %607 = vmatpush1.msra.mxu0 0.0
    %608 = vmatprep.subr.mxu0 0.0
    %609 = vmatpush1.msra.mxu0 0.0
    %610 = vmatprep.subr.mxu0 0.0
    %611 = vmatpush1.msra.mxu0 0.0
    %612 = vmatprep.subr.mxu0 0.0
    %613 = vmatpush1.msra.mxu0 0.0
    %614 = vmatprep.subr.mxu0 0.0
    %615 = vmatpush1.msra.mxu0 0.0
    %616 = vmatprep.subr.mxu0 0.0
    %617 = vmatpush1.msra.mxu0 0.0
    %618 = vmatprep.subr.mxu0 0.0
    %619 = vmatpush1.msra.mxu0 0.0
    %620 = vmatprep.subr.mxu0 0.0
    %621 = vmatpush1.msra.mxu0 0.0
    %622 = vmatprep.subr.mxu0 0.0
    %623 = vmatpush1.msra.mxu0 0.0
    %624 = vmatprep.subr.mxu0 0.0
    %625 = vmatpush1.msra.mxu0 0.0
    %626 = vmatprep.subr.mxu0 0.0
    %627 = vmatpush1.msra.mxu0 0.0
    %628 = vmatprep.subr.mxu0 0.0
    %629 = vmatpush1.msra.mxu0 0.0
    %630 = vmatprep.subr.mxu0 0.0
    %631 = vmatpush1.msra.mxu0 0.0
    %632 = vmatprep.subr.mxu0 0.0
    %633 = vmatpush1.msra.mxu0 0.0
    %634 = vmatprep.subr.mxu0 0.0
    %635 = vmatpush1.msra.mxu0 0.0
    %636 = vmatprep.subr.mxu0 0.0
    %637 = vmatpush1.msra.mxu0 0.0
    %638 = vmatprep.subr.mxu0 0.0
    %639 = vmatpush1.msra.mxu0 0.0
    %640 = vmatprep.subr.mxu0 0.0
    %641 = vmatpush1.msra.mxu0 0.0
    %642 = vmatprep.subr.mxu0 0.0
    %643 = vmatpush1.msra.mxu0 0.0
    %644 = vmatprep.subr.mxu0 0.0
    %645 = vmatpush1.msra.mxu0 0.0
    %646 = vmatprep.subr.mxu0 0.0
    %647 = vmatpush1.msra.mxu0 0.0
    %648 = vmatprep.subr.mxu0 0.0
    %649 = vmatpush1.msra.mxu0 0.0
    %650 = vmatprep.subr.mxu0 0.0
    %651 = vmatpush1.msra.mxu0 0.0
    %652 = vmatprep.subr.mxu0 0.0
    %653 = vmatpush1.msra.mxu0 0.0
    %654 = vmatprep.subr.mxu0 0.0
    %655 = vmatpush1.msra.mxu0 0.0
    %656 = vmatprep.mubr.f32.mxu0 0.0
    %657 = vmatmul.mubr.f32.gmra.mrb[0].mxu0 %v590
    %v658 = vpop.f32.mrb[0].mxu0
    %v659 = vadd.f32 0.0, %v658
    %v660 = vpop.f32.mrb[0].mxu0
    %661 = vdwg.mxu0
    %v663 = vrot.slane %v659, 5
    %v664 = vrot.slane %v659, 6
    %v667 = vadd.f32 %v169, %v663
    %v668 = vadd.f32 %v174, %v664
    %v669 = vxor.u32 %v667, 2147483648
    %v670 = vxor.u32 %v668, 2147483648
    %v671 = vmul.f32 %v669, 1.442695
    %v672 = vpow.pop %v671
    %v673 = vmul.f32 %v670, 1.442695
    %v674 = vpow.pop %v673
    %v675 = vadd.f32 %v672, 1.0
    %v676 = vadd.f32 %v674, 1.0
    %v677 = vrcp.pop %v675
    %v678 = vmul.f32 1.0, %v677
    %v679 = vrcp.pop %v676
    %v680 = vmul.f32 1.0, %v679
    %v681 = vtanh.pop %v667
    %v682 = vtanh.pop %v668
    %v685 = vrot.slane %v569, 7
    %v686 = vrot.slane %v570, 7
    %v689 = vmul.f32 %v678, %v685
    %v690 = vmul.f32 %v680, %v686
    %693 = vrot.lane.b32.xlu0 %v681, 32
    %v694 = vpop.permute.xlu0 %693
    %695 = vrot.lane.b32.xlu0 %v682, 32
    %v696 = vpop.permute.xlu0 %695
    %v699 = vmul.f32 %v678, %v694
    %v700 = vmul.f32 %v680, %v696
    %703 = vrot.lane.b32.xlu0 %v699, 32
    %v704 = vpop.permute.xlu0 %703
    %705 = vrot.lane.b32.xlu0 %v700, 32
    %v706 = vpop.permute.xlu0 %705
    %v709 = vadd.f32 %v689, %v704
    %v710 = vadd.f32 %v690, %v706
    %v711 = vtanh.pop %v709
    %v712 = vtanh.pop %v710
    %715 = vrot.lane.b32.xlu0 %v711, 32
    %v716 = vpop.permute.xlu0 %715
    %717 = vrot.lane.b32.xlu0 %v712, 32
    %v718 = vpop.permute.xlu0 %717
    %v721 = vmul.f32 %v678, %v716
    %v722 = vmul.f32 %v680, %v718
    %v725 = vrot.slane %v721, 3
    %v726 = vrot.slane %v722, 2
    %v727 = vsel %vm308, %v726, %v725
    %728 = vrot.lane.b32.xlu0 %v727, 64
    %v729 = vpop.permute.xlu0 %728
    %v730 = vsel %vm177, %v729, 0
    %732 = vmatprep.subr.mxu0 0.0
    %733 = vmatpush1.msra.mxu0 %v80
    %734 = vmatprep.subr.mxu0 0.0
    %735 = vmatpush1.msra.mxu0 %v81
    %736 = vmatprep.subr.mxu0 0.0
    %737 = vmatpush1.msra.mxu0 %v82
    %738 = vmatprep.subr.mxu0 0.0
    %739 = vmatpush1.msra.mxu0 %v83
    %740 = vmatprep.subr.mxu0 0.0
    %741 = vmatpush1.msra.mxu0 0.0
    %742 = vmatprep.subr.mxu0 0.0
    %743 = vmatpush1.msra.mxu0 0.0
    %744 = vmatprep.subr.mxu0 0.0
    %745 = vmatpush1.msra.mxu0 0.0
    %746 = vmatprep.subr.mxu0 0.0
    %747 = vmatpush1.msra.mxu0 0.0
    %748 = vmatprep.subr.mxu0 0.0
    %749 = vmatpush1.msra.mxu0 0.0
    %750 = vmatprep.subr.mxu0 0.0
    %751 = vmatpush1.msra.mxu0 0.0
    %752 = vmatprep.subr.mxu0 0.0
    %753 = vmatpush1.msra.mxu0 0.0
    %754 = vmatprep.subr.mxu0 0.0
    %755 = vmatpush1.msra.mxu0 0.0
    %756 = vmatprep.subr.mxu0 0.0
    %757 = vmatpush1.msra.mxu0 0.0
    %758 = vmatprep.subr.mxu0 0.0
    %759 = vmatpush1.msra.mxu0 0.0
    %760 = vmatprep.subr.mxu0 0.0
    %761 = vmatpush1.msra.mxu0 0.0
    %762 = vmatprep.subr.mxu0 0.0
    %763 = vmatpush1.msra.mxu0 0.0
    %764 = vmatprep.subr.mxu0 0.0
    %765 = vmatpush1.msra.mxu0 0.0
    %766 = vmatprep.subr.mxu0 0.0
    %767 = vmatpush1.msra.mxu0 0.0
    %768 = vmatprep.subr.mxu0 0.0
    %769 = vmatpush1.msra.mxu0 0.0
    %770 = vmatprep.subr.mxu0 0.0
    %771 = vmatpush1.msra.mxu0 0.0
    %772 = vmatprep.subr.mxu0 0.0
    %773 = vmatpush1.msra.mxu0 0.0
    %774 = vmatprep.subr.mxu0 0.0
    %775 = vmatpush1.msra.mxu0 0.0
    %776 = vmatprep.subr.mxu0 0.0
    %777 = vmatpush1.msra.mxu0 0.0
    %778 = vmatprep.subr.mxu0 0.0
    %779 = vmatpush1.msra.mxu0 0.0
    %780 = vmatprep.subr.mxu0 0.0
    %781 = vmatpush1.msra.mxu0 0.0
    %782 = vmatprep.subr.mxu0 0.0
    %783 = vmatpush1.msra.mxu0 0.0
    %784 = vmatprep.subr.mxu0 0.0
    %785 = vmatpush1.msra.mxu0 0.0
    %786 = vmatprep.subr.mxu0 0.0
    %787 = vmatpush1.msra.mxu0 0.0
    %788 = vmatprep.subr.mxu0 0.0
    %789 = vmatpush1.msra.mxu0 0.0
    %790 = vmatprep.subr.mxu0 0.0
    %791 = vmatpush1.msra.mxu0 0.0
    %792 = vmatprep.subr.mxu0 0.0
    %793 = vmatpush1.msra.mxu0 0.0
    %794 = vmatprep.subr.mxu0 0.0
    %795 = vmatpush1.msra.mxu0 0.0
    %796 = vmatprep.mubr.f32.mxu0 0.0
    %797 = vmatmul.mubr.f32.gmra.mrb[0].mxu0 %v730
    %v798 = vpop.f32.mrb[0].mxu0
    %v799 = vadd.f32 0.0, %v798
    %v800 = vpop.f32.mrb[0].mxu0
    %801 = vdwg.mxu0
    %v803 = vrot.slane %v799, 4
    %v804 = vrot.slane %v799, 5
    %v807 = vadd.f32 %v169, %v803
    %v808 = vadd.f32 %v174, %v804
    %v809 = vxor.u32 %v807, 2147483648
    %v810 = vxor.u32 %v808, 2147483648
    %v811 = vmul.f32 %v809, 1.442695
    %v812 = vpow.pop %v811
    %v813 = vmul.f32 %v810, 1.442695
    %v814 = vpow.pop %v813
    %v815 = vadd.f32 %v812, 1.0
    %v816 = vadd.f32 %v814, 1.0
    %v817 = vrcp.pop %v815
    %v818 = vmul.f32 1.0, %v817
    %v819 = vrcp.pop %v816
    %v820 = vmul.f32 1.0, %v819
    %v821 = vtanh.pop %v807
    %v822 = vtanh.pop %v808
    %v825 = vrot.slane %v709, 7
    %v826 = vrot.slane %v710, 7
    %v829 = vmul.f32 %v818, %v825
    %v830 = vmul.f32 %v820, %v826
    %833 = vrot.lane.b32.xlu0 %v821, 32
    %v834 = vpop.permute.xlu0 %833
    %835 = vrot.lane.b32.xlu0 %v822, 32
    %v836 = vpop.permute.xlu0 %835
    %v839 = vmul.f32 %v818, %v834
    %v840 = vmul.f32 %v820, %v836
    %843 = vrot.lane.b32.xlu0 %v839, 32
    %v844 = vpop.permute.xlu0 %843
    %845 = vrot.lane.b32.xlu0 %v840, 32
    %v846 = vpop.permute.xlu0 %845
    %v849 = vadd.f32 %v829, %v844
    %v850 = vadd.f32 %v830, %v846
    %v851 = vtanh.pop %v849
    %v852 = vtanh.pop %v850
    %855 = vrot.lane.b32.xlu0 %v851, 32
    %v856 = vpop.permute.xlu0 %855
    %857 = vrot.lane.b32.xlu0 %v852, 32
    %v858 = vpop.permute.xlu0 %857
    %v861 = vmul.f32 %v818, %v856
    %v862 = vmul.f32 %v820, %v858
    %v865 = vrot.slane %v861, 4
    %v866 = vrot.slane %v862, 3
    %v867 = vsel %vm308, %v866, %v865
    %868 = vrot.lane.b32.xlu0 %v867, 64
    %v869 = vpop.permute.xlu0 %868
    %v870 = vsel %vm177, %v869, 0
    %872 = vmatprep.subr.mxu0 0.0
    %873 = vmatpush1.msra.mxu0 %v80
    %874 = vmatprep.subr.mxu0 0.0
    %875 = vmatpush1.msra.mxu0 %v81
    %876 = vmatprep.subr.mxu0 0.0
    %877 = vmatpush1.msra.mxu0 %v82
    %878 = vmatprep.subr.mxu0 0.0
    %879 = vmatpush1.msra.mxu0 %v83
    %880 = vmatprep.subr.mxu0 0.0
    %881 = vmatpush1.msra.mxu0 0.0
    %882 = vmatprep.subr.mxu0 0.0
    %883 = vmatpush1.msra.mxu0 0.0
    %884 = vmatprep.subr.mxu0 0.0
    %885 = vmatpush1.msra.mxu0 0.0
    %886 = vmatprep.subr.mxu0 0.0
    %887 = vmatpush1.msra.mxu0 0.0
    %888 = vmatprep.subr.mxu0 0.0
    %889 = vmatpush1.msra.mxu0 0.0
    %890 = vmatprep.subr.mxu0 0.0
    %891 = vmatpush1.msra.mxu0 0.0
    %892 = vmatprep.subr.mxu0 0.0
    %893 = vmatpush1.msra.mxu0 0.0
    %894 = vmatprep.subr.mxu0 0.0
    %895 = vmatpush1.msra.mxu0 0.0
    %896 = vmatprep.subr.mxu0 0.0
    %897 = vmatpush1.msra.mxu0 0.0
    %898 = vmatprep.subr.mxu0 0.0
    %899 = vmatpush1.msra.mxu0 0.0
    %900 = vmatprep.subr.mxu0 0.0
    %901 = vmatpush1.msra.mxu0 0.0
    %902 = vmatprep.subr.mxu0 0.0
    %903 = vmatpush1.msra.mxu0 0.0
    %904 = vmatprep.subr.mxu0 0.0
    %905 = vmatpush1.msra.mxu0 0.0
    %906 = vmatprep.subr.mxu0 0.0
    %907 = vmatpush1.msra.mxu0 0.0
    %908 = vmatprep.subr.mxu0 0.0
    %909 = vmatpush1.msra.mxu0 0.0
    %910 = vmatprep.subr.mxu0 0.0
    %911 = vmatpush1.msra.mxu0 0.0
    %912 = vmatprep.subr.mxu0 0.0
    %913 = vmatpush1.msra.mxu0 0.0
    %914 = vmatprep.subr.mxu0 0.0
    %915 = vmatpush1.msra.mxu0 0.0
    %916 = vmatprep.subr.mxu0 0.0
    %917 = vmatpush1.msra.mxu0 0.0
    %918 = vmatprep.subr.mxu0 0.0
    %919 = vmatpush1.msra.mxu0 0.0
    %920 = vmatprep.subr.mxu0 0.0
    %921 = vmatpush1.msra.mxu0 0.0
    %922 = vmatprep.subr.mxu0 0.0
    %923 = vmatpush1.msra.mxu0 0.0
    %924 = vmatprep.subr.mxu0 0.0
    %925 = vmatpush1.msra.mxu0 0.0
    %926 = vmatprep.subr.mxu0 0.0
    %927 = vmatpush1.msra.mxu0 0.0
    %928 = vmatprep.subr.mxu0 0.0
    %929 = vmatpush1.msra.mxu0 0.0
    %930 = vmatprep.subr.mxu0 0.0
    %931 = vmatpush1.msra.mxu0 0.0
    %932 = vmatprep.subr.mxu0 0.0
    %933 = vmatpush1.msra.mxu0 0.0
    %934 = vmatprep.subr.mxu0 0.0
    %935 = vmatpush1.msra.mxu0 0.0
    %936 = vmatprep.mubr.f32.mxu0 0.0
    %937 = vmatmul.mubr.f32.gmra.mrb[0].mxu0 %v870
    %v938 = vpop.f32.mrb[0].mxu0
    %v939 = vadd.f32 0.0, %v938
    %v940 = vpop.f32.mrb[0].mxu0
    %941 = vdwg.mxu0
    %v943 = vrot.slane %v939, 3
    %v944 = vrot.slane %v939, 4
    %v947 = vadd.f32 %v169, %v943
    %v948 = vadd.f32 %v174, %v944
    %v949 = vxor.u32 %v947, 2147483648
    %v950 = vxor.u32 %v948, 2147483648
    %v951 = vmul.f32 %v949, 1.442695
    %v952 = vpow.pop %v951
    %v953 = vmul.f32 %v950, 1.442695
    %v954 = vpow.pop %v953
    %v955 = vadd.f32 %v952, 1.0
    %v956 = vadd.f32 %v954, 1.0
    %v957 = vrcp.pop %v955
    %v958 = vmul.f32 1.0, %v957
    %v959 = vrcp.pop %v956
    %v960 = vmul.f32 1.0, %v959
    %v961 = vtanh.pop %v947
    %v962 = vtanh.pop %v948
    %v965 = vrot.slane %v849, 7
    %v966 = vrot.slane %v850, 7
    %v969 = vmul.f32 %v958, %v965
    %v970 = vmul.f32 %v960, %v966
    %973 = vrot.lane.b32.xlu0 %v961, 32
    %v974 = vpop.permute.xlu0 %973
    %975 = vrot.lane.b32.xlu0 %v962, 32
    %v976 = vpop.permute.xlu0 %975
    %v979 = vmul.f32 %v958, %v974
    %v980 = vmul.f32 %v960, %v976
    %983 = vrot.lane.b32.xlu0 %v979, 32
    %v984 = vpop.permute.xlu0 %983
    %985 = vrot.lane.b32.xlu0 %v980, 32
    %v986 = vpop.permute.xlu0 %985
    %v989 = vadd.f32 %v969, %v984
    %v990 = vadd.f32 %v970, %v986
    %v991 = vtanh.pop %v989
    %v992 = vtanh.pop %v990
    %995 = vrot.lane.b32.xlu0 %v991, 32
    %v996 = vpop.permute.xlu0 %995
    %997 = vrot.lane.b32.xlu0 %v992, 32
    %v998 = vpop.permute.xlu0 %997
    %v1001 = vmul.f32 %v958, %v996
    %v1002 = vmul.f32 %v960, %v998
    %v1005 = vrot.slane %v1001, 5
    %v1006 = vrot.slane %v1002, 4
    %v1007 = vsel %vm308, %v1006, %v1005
    %1008 = vrot.lane.b32.xlu0 %v1007, 64
    %v1009 = vpop.permute.xlu0 %1008
    %v1010 = vsel %vm177, %v1009, 0
    %1012 = vmatprep.subr.mxu0 0.0
    %1013 = vmatpush1.msra.mxu0 %v80
    %1014 = vmatprep.subr.mxu0 0.0
    %1015 = vmatpush1.msra.mxu0 %v81
    %1016 = vmatprep.subr.mxu0 0.0
    %1017 = vmatpush1.msra.mxu0 %v82
    %1018 = vmatprep.subr.mxu0 0.0
    %1019 = vmatpush1.msra.mxu0 %v83
    %1020 = vmatprep.subr.mxu0 0.0
    %1021 = vmatpush1.msra.mxu0 0.0
    %1022 = vmatprep.subr.mxu0 0.0
    %1023 = vmatpush1.msra.mxu0 0.0
    %1024 = vmatprep.subr.mxu0 0.0
    %1025 = vmatpush1.msra.mxu0 0.0
    %1026 = vmatprep.subr.mxu0 0.0
    %1027 = vmatpush1.msra.mxu0 0.0
    %1028 = vmatprep.subr.mxu0 0.0
    %1029 = vmatpush1.msra.mxu0 0.0
    %1030 = vmatprep.subr.mxu0 0.0
    %1031 = vmatpush1.msra.mxu0 0.0
    %1032 = vmatprep.subr.mxu0 0.0
    %1033 = vmatpush1.msra.mxu0 0.0
    %1034 = vmatprep.subr.mxu0 0.0
    %1035 = vmatpush1.msra.mxu0 0.0
    %1036 = vmatprep.subr.mxu0 0.0
    %1037 = vmatpush1.msra.mxu0 0.0
    %1038 = vmatprep.subr.mxu0 0.0
    %1039 = vmatpush1.msra.mxu0 0.0
    %1040 = vmatprep.subr.mxu0 0.0
    %1041 = vmatpush1.msra.mxu0 0.0
    %1042 = vmatprep.subr.mxu0 0.0
    %1043 = vmatpush1.msra.mxu0 0.0
    %1044 = vmatprep.subr.mxu0 0.0
    %1045 = vmatpush1.msra.mxu0 0.0
    %1046 = vmatprep.subr.mxu0 0.0
    %1047 = vmatpush1.msra.mxu0 0.0
    %1048 = vmatprep.subr.mxu0 0.0
    %1049 = vmatpush1.msra.mxu0 0.0
    %1050 = vmatprep.subr.mxu0 0.0
    %1051 = vmatpush1.msra.mxu0 0.0
    %1052 = vmatprep.subr.mxu0 0.0
    %1053 = vmatpush1.msra.mxu0 0.0
    %1054 = vmatprep.subr.mxu0 0.0
    %1055 = vmatpush1.msra.mxu0 0.0
    %1056 = vmatprep.subr.mxu0 0.0
    %1057 = vmatpush1.msra.mxu0 0.0
    %1058 = vmatprep.subr.mxu0 0.0
    %1059 = vmatpush1.msra.mxu0 0.0
    %1060 = vmatprep.subr.mxu0 0.0
    %1061 = vmatpush1.msra.mxu0 0.0
    %1062 = vmatprep.subr.mxu0 0.0
    %1063 = vmatpush1.msra.mxu0 0.0
    %1064 = vmatprep.subr.mxu0 0.0
    %1065 = vmatpush1.msra.mxu0 0.0
    %1066 = vmatprep.subr.mxu0 0.0
    %1067 = vmatpush1.msra.mxu0 0.0
    %1068 = vmatprep.subr.mxu0 0.0
    %1069 = vmatpush1.msra.mxu0 0.0
    %1070 = vmatprep.subr.mxu0 0.0
    %1071 = vmatpush1.msra.mxu0 0.0
    %1072 = vmatprep.subr.mxu0 0.0
    %1073 = vmatpush1.msra.mxu0 0.0
    %1074 = vmatprep.subr.mxu0 0.0
    %1075 = vmatpush1.msra.mxu0 0.0
    %1076 = vmatprep.mubr.f32.mxu0 0.0
    %1077 = vmatmul.mubr.f32.gmra.mrb[0].mxu0 %v1010
    %v1078 = vpop.f32.mrb[0].mxu0
    %v1079 = vadd.f32 0.0, %v1078
    %v1080 = vpop.f32.mrb[0].mxu0
    %1081 = vdwg.mxu0
    %v1083 = vrot.slane %v1079, 2
    %v1084 = vrot.slane %v1079, 3
    %v1087 = vadd.f32 %v169, %v1083
    %v1088 = vadd.f32 %v174, %v1084
    %v1089 = vxor.u32 %v1087, 2147483648
    %v1090 = vxor.u32 %v1088, 2147483648
    %v1091 = vmul.f32 %v1089, 1.442695
    %v1092 = vpow.pop %v1091
    %v1093 = vmul.f32 %v1090, 1.442695
    %v1094 = vpow.pop %v1093
    %v1095 = vadd.f32 %v1092, 1.0
    %v1096 = vadd.f32 %v1094, 1.0
    %v1097 = vrcp.pop %v1095
    %v1098 = vmul.f32 1.0, %v1097
    %v1099 = vrcp.pop %v1096
    %v1100 = vmul.f32 1.0, %v1099
    %v1101 = vtanh.pop %v1087
    %v1102 = vtanh.pop %v1088
    %v1105 = vrot.slane %v989, 7
    %v1106 = vrot.slane %v990, 7
    %v1109 = vmul.f32 %v1098, %v1105
    %v1110 = vmul.f32 %v1100, %v1106
    %1113 = vrot.lane.b32.xlu0 %v1101, 32
    %v1114 = vpop.permute.xlu0 %1113
    %1115 = vrot.lane.b32.xlu0 %v1102, 32
    %v1116 = vpop.permute.xlu0 %1115
    %v1119 = vmul.f32 %v1098, %v1114
    %v1120 = vmul.f32 %v1100, %v1116
    %1123 = vrot.lane.b32.xlu0 %v1119, 32
    %v1124 = vpop.permute.xlu0 %1123
    %1125 = vrot.lane.b32.xlu0 %v1120, 32
    %v1126 = vpop.permute.xlu0 %1125
    %v1129 = vadd.f32 %v1109, %v1124
    %v1130 = vadd.f32 %v1110, %v1126
    %v1131 = vtanh.pop %v1129
    %v1132 = vtanh.pop %v1130
    %1135 = vrot.lane.b32.xlu0 %v1131, 32
    %v1136 = vpop.permute.xlu0 %1135
    %1137 = vrot.lane.b32.xlu0 %v1132, 32
    %v1138 = vpop.permute.xlu0 %1137
    %v1141 = vmul.f32 %v1098, %v1136
    %v1142 = vmul.f32 %v1100, %v1138
    %v1145 = vrot.slane %v1141, 6
    %v1146 = vrot.slane %v1142, 5
    %v1147 = vsel %vm308, %v1146, %v1145
    %1148 = vrot.lane.b32.xlu0 %v1147, 64
    %v1149 = vpop.permute.xlu0 %1148
    %v1150 = vsel %vm177, %v1149, 0
    %1152 = vmatprep.subr.mxu0 0.0
    %1153 = vmatpush1.msra.mxu0 %v80
    %1154 = vmatprep.subr.mxu0 0.0
    %1155 = vmatpush1.msra.mxu0 %v81
    %1156 = vmatprep.subr.mxu0 0.0
    %1157 = vmatpush1.msra.mxu0 %v82
    %1158 = vmatprep.subr.mxu0 0.0
    %1159 = vmatpush1.msra.mxu0 %v83
    %1160 = vmatprep.subr.mxu0 0.0
    %1161 = vmatpush1.msra.mxu0 0.0
    %1162 = vmatprep.subr.mxu0 0.0
    %1163 = vmatpush1.msra.mxu0 0.0
    %1164 = vmatprep.subr.mxu0 0.0
    %1165 = vmatpush1.msra.mxu0 0.0
    %1166 = vmatprep.subr.mxu0 0.0
    %1167 = vmatpush1.msra.mxu0 0.0
    %1168 = vmatprep.subr.mxu0 0.0
    %1169 = vmatpush1.msra.mxu0 0.0
    %1170 = vmatprep.subr.mxu0 0.0
    %1171 = vmatpush1.msra.mxu0 0.0
    %1172 = vmatprep.subr.mxu0 0.0
    %1173 = vmatpush1.msra.mxu0 0.0
    %1174 = vmatprep.subr.mxu0 0.0
    %1175 = vmatpush1.msra.mxu0 0.0
    %1176 = vmatprep.subr.mxu0 0.0
    %1177 = vmatpush1.msra.mxu0 0.0
    %1178 = vmatprep.subr.mxu0 0.0
    %1179 = vmatpush1.msra.mxu0 0.0
    %1180 = vmatprep.subr.mxu0 0.0
    %1181 = vmatpush1.msra.mxu0 0.0
    %1182 = vmatprep.subr.mxu0 0.0
    %1183 = vmatpush1.msra.mxu0 0.0
    %1184 = vmatprep.subr.mxu0 0.0
    %1185 = vmatpush1.msra.mxu0 0.0
    %1186 = vmatprep.subr.mxu0 0.0
    %1187 = vmatpush1.msra.mxu0 0.0
    %1188 = vmatprep.subr.mxu0 0.0
    %1189 = vmatpush1.msra.mxu0 0.0
    %1190 = vmatprep.subr.mxu0 0.0
    %1191 = vmatpush1.msra.mxu0 0.0
    %1192 = vmatprep.subr.mxu0 0.0
    %1193 = vmatpush1.msra.mxu0 0.0
    %1194 = vmatprep.subr.mxu0 0.0
    %1195 = vmatpush1.msra.mxu0 0.0
    %1196 = vmatprep.subr.mxu0 0.0
    %1197 = vmatpush1.msra.mxu0 0.0
    %1198 = vmatprep.subr.mxu0 0.0
    %1199 = vmatpush1.msra.mxu0 0.0
    %1200 = vmatprep.subr.mxu0 0.0
    %1201 = vmatpush1.msra.mxu0 0.0
    %1202 = vmatprep.subr.mxu0 0.0
    %1203 = vmatpush1.msra.mxu0 0.0
    %1204 = vmatprep.subr.mxu0 0.0
    %1205 = vmatpush1.msra.mxu0 0.0
    %1206 = vmatprep.subr.mxu0 0.0
    %1207 = vmatpush1.msra.mxu0 0.0
    %1208 = vmatprep.subr.mxu0 0.0
    %1209 = vmatpush1.msra.mxu0 0.0
    %1210 = vmatprep.subr.mxu0 0.0
    %1211 = vmatpush1.msra.mxu0 0.0
    %1212 = vmatprep.subr.mxu0 0.0
    %1213 = vmatpush1.msra.mxu0 0.0
    %1214 = vmatprep.subr.mxu0 0.0
    %1215 = vmatpush1.msra.mxu0 0.0
    %1216 = vmatprep.mubr.f32.mxu0 0.0
    %1217 = vmatmul.mubr.f32.gmra.mrb[0].mxu0 %v1150
    %v1218 = vpop.f32.mrb[0].mxu0
    %v1219 = vadd.f32 0.0, %v1218
    %v1220 = vpop.f32.mrb[0].mxu0
    %1221 = vdwg.mxu0
    %v1223 = vrot.slane %v1219, 1
    %v1224 = vrot.slane %v1219, 2
    %v1227 = vadd.f32 %v169, %v1223
    %v1228 = vadd.f32 %v174, %v1224
    %v1229 = vxor.u32 %v1227, 2147483648
    %v1230 = vxor.u32 %v1228, 2147483648
    %v1231 = vmul.f32 %v1229, 1.442695
    %v1232 = vpow.pop %v1231
    %v1233 = vmul.f32 %v1230, 1.442695
    %v1234 = vpow.pop %v1233
    %v1235 = vadd.f32 %v1232, 1.0
    %v1236 = vadd.f32 %v1234, 1.0
    %v1237 = vrcp.pop %v1235
    %v1238 = vmul.f32 1.0, %v1237
    %v1239 = vrcp.pop %v1236
    %v1240 = vmul.f32 1.0, %v1239
    %v1241 = vtanh.pop %v1227
    %v1242 = vtanh.pop %v1228
    %v1245 = vrot.slane %v1129, 7
    %v1246 = vrot.slane %v1130, 7
    %v1249 = vmul.f32 %v1238, %v1245
    %v1250 = vmul.f32 %v1240, %v1246
    %1253 = vrot.lane.b32.xlu0 %v1241, 32
    %v1254 = vpop.permute.xlu0 %1253
    %1255 = vrot.lane.b32.xlu0 %v1242, 32
    %v1256 = vpop.permute.xlu0 %1255
    %v1259 = vmul.f32 %v1238, %v1254
    %v1260 = vmul.f32 %v1240, %v1256
    %1263 = vrot.lane.b32.xlu0 %v1259, 32
    %v1264 = vpop.permute.xlu0 %1263
    %1265 = vrot.lane.b32.xlu0 %v1260, 32
    %v1266 = vpop.permute.xlu0 %1265
    %v1269 = vadd.f32 %v1249, %v1264
    %v1270 = vadd.f32 %v1250, %v1266
    %v1271 = vtanh.pop %v1269
    %v1272 = vtanh.pop %v1270
    %1275 = vrot.lane.b32.xlu0 %v1271, 32
    %v1276 = vpop.permute.xlu0 %1275
    %1277 = vrot.lane.b32.xlu0 %v1272, 32
    %v1278 = vpop.permute.xlu0 %1277
    %v1281 = vmul.f32 %v1238, %v1276
    %v1282 = vmul.f32 %v1240, %v1278
    %v1283 = vand.u32 2147483647, %v76
    %vm1284 = vcmp.le.f32.partialorder %v1283, 0.7853982
    %vm1285 = vcmp.lt.s32.totalorder %v76, 0
    %v1286 = vand.u32 %v76, 2139095040
    %v1287 = vshrl.u32 %v1286, 23
    %v1288 = vsub.s32 %v1287, 127
    %v1289 = vand.u32 2147483647, %v76
    %v1290 = vand.u32 %v1289, 8388607
    %v1291 = vor.u32 %v1290, 8388608
    %v1292 = vsub.s32 0, %v1291
    %v1293 = vadd.s32 %v1288, 1
    %vm1294 = vcmp.gt.s32.totalorder %v1293, 0
    %v1295 = vsel %vm1294, %v1293, 0
    %v1296 = vshrl.u32 %v1295, 5
    %v1297 = vand.u32 %v1295, 31
    %v1298 = vsub.s32 32, %v1297
    %v1299 = vshrl.u32 683565275, %v1298
    %v1300 = vshll.u32 683565275, %v1297
    %v1301 = vshrl.u32 2475754826, %v1298
    %v1302 = vor.u32 %v1300, %v1301
    %v1303 = vshll.u32 2475754826, %v1297
    %v1304 = vshrl.u32 2131351028, %v1298
    %v1305 = vor.u32 %v1303, %v1304
    %v1306 = vshll.u32 2131351028, %v1297
    %v1307 = vshrl.u32 2102212464, %v1298
    %v1308 = vor.u32 %v1306, %v1307
    %v1309 = vshll.u32 2102212464, %v1297
    %v1310 = vshrl.u32 920167782, %v1298
    %v1311 = vor.u32 %v1309, %v1310
    %v1312 = vshll.u32 920167782, %v1297
    %v1313 = vshrl.u32 1326507024, %v1298
    %v1314 = vor.u32 %v1312, %v1313
    %vm1315 = vcmp.lt.s32.totalorder %v1296, 1
    %vm1316 = vcmp.lt.s32.totalorder %v1296, 2
    %vm1317 = vcmp.lt.s32.totalorder %v1296, 3
    %vm1318 = vcmp.lt.s32.totalorder %v1296, 4
    %v1319 = vsel %vm1315, %v1299, %v1302
    %v1320 = vsel %vm1318, %v1308, 2102212464
    %v1321 = vsel %vm1317, %v1305, %v1320
    %v1322 = vsel %vm1316, %v1319, %v1321
    %v1323 = vsel %vm1315, %v1302, %v1305
    %v1324 = vsel %vm1318, %v1311, 920167782
    %v1325 = vsel %vm1317, %v1308, %v1324
    %v1326 = vsel %vm1316, %v1323, %v1325
    %v1327 = vsel %vm1315, %v1305, %v1308
    %v1328 = vsel %vm1318, %v1314, 1326507024
    %v1329 = vsel %vm1317, %v1311, %v1328
    %v1330 = vsel %vm1316, %v1327, %v1329
    %v1331 = vshll.u32 %v1291, 8
    %v1332 = vmul.u32.u64.compose %v1331, %v1330
    %v1333 = vextract.low.u32 %v1332
    %v1334 = vextract.high.u32 %v1332
    %v1335 = vmul.u32.u64.compose %v1331, %v1326
    %v1336 = vextract.low.u32 %v1335
    %v1337 = vextract.high.u32 %v1335
    %v1338 = vmul.u32 %v1331, %v1322
    %v1339 = vadd.s32 %v1334, %v1336
    %vm1340 = vc.u32 %v1334, %v1336
    %v1341 = vadd.s32 %v1337, 1
    %v1342 = vsel %vm1340, %v1341, %v1337
    %v1343 = vadd.s32 %v1338, %v1342
    %v1344 = vadd.s32 %v1343, 536870912
    %v1345 = vshrl.u32 %v1344, 30
    %v1346 = vshll.u32 %v1345, 30
    %v1347 = vsub.s32 %v1343, %v1346
    %vm1348 = vcmp.lt.s32.totalorder %v1347, 0
    %v1349 = vsub.s32 0, %v1347
    %v1350 = vsel %vm1348, %v1349, %v1347
    %v1351 = vclz %v1350
    %v1352 = vsub.s32 %v1351, 2
    %vm1353 = vcmp.gt.s32.totalorder 0, %v1352
    %v1354 = vsel %vm1353, 0, %v1352
    %v1355 = vsub.s32 32, %v1354
    %v1356 = vshll.u32 %v1347, %v1354
    %v1357 = vshrl.u32 %v1339, %v1355
    %v1358 = vor.u32 %v1356, %v1357
    %v1359 = vsub.s32 4294967266, %v1354
    %v1360 = vadd.s32 %v1359, 127
    %v1361 = vshll.u32 %v1360, 23
    %v1362 = vor.u32 4788187, %v1361
    %v1363 = vand.u32 2147483647, %v1362
    %v1365 = vcvt.s32.f32 %v1358
    %v1366 = vmul.f32 %v1365, %v1363
    %v1367 = vxor.u32 %v1366, 2147483648
    %v1368 = vsel %vm1285, %v1367, %v1366
    %v1369 = vsub.s32 4, %v1345
    %v1370 = vsel %vm1285, %v1369, %v1345
    %v1371 = vsel %vm1284, %v76, %v1368
    %v1372 = vsel %vm1284, 0, %v1370
    %v1373 = vcosq.f32.pop %v1371
    %v1374 = vsinq.f32.pop %v1371
    %vm1375 = vweird.f32 %v76
    %v1376 = vand.u32 %v1372, 3
    %vm1377 = vcmp.lt.s32.totalorder %v1376, 2
    %vm1378 = vcmp.eq.s32.totalorder %v1376, 0
    %v1379 = vxor.u32 %v1374, 2147483648
    %v1380 = vsel %vm1378, %v1373, %v1379
    %vm1381 = vcmp.eq.s32.totalorder %v1376, 2
    %v1382 = vxor.u32 %v1373, 2147483648
    %v1383 = vsel %vm1381, %v1382, %v1374
    %v1384 = vsel %vm1377, %v1380, %v1383
    %v1385 = vsel %vm1375, nan, %v1384
    %v1386 = vand.u32 2147483647, %v77
    %vm1387 = vcmp.le.f32.partialorder %v1386, 0.7853982
    %vm1388 = vcmp.lt.s32.totalorder %v77, 0
    %v1389 = vand.u32 %v77, 2139095040
    %v1390 = vshrl.u32 %v1389, 23
    %v1391 = vsub.s32 %v1390, 127
    %v1392 = vand.u32 2147483647, %v77
    %v1393 = vand.u32 %v1392, 8388607
    %v1394 = vor.u32 %v1393, 8388608
    %v1395 = vsub.s32 0, %v1394
    %v1396 = vadd.s32 %v1391, 1
    %vm1397 = vcmp.gt.s32.totalorder %v1396, 0
    %v1398 = vsel %vm1397, %v1396, 0
    %v1399 = vshrl.u32 %v1398, 5
    %v1400 = vand.u32 %v1398, 31
    %v1401 = vsub.s32 32, %v1400
    %v1402 = vshrl.u32 683565275, %v1401
    %v1403 = vshll.u32 683565275, %v1400
    %v1404 = vshrl.u32 2475754826, %v1401
    %v1405 = vor.u32 %v1403, %v1404
    %v1406 = vshll.u32 2475754826, %v1400
    %v1407 = vshrl.u32 2131351028, %v1401
    %v1408 = vor.u32 %v1406, %v1407
    %v1409 = vshll.u32 2131351028, %v1400
    %v1410 = vshrl.u32 2102212464, %v1401
    %v1411 = vor.u32 %v1409, %v1410
    %v1412 = vshll.u32 2102212464, %v1400
    %v1413 = vshrl.u32 920167782, %v1401
    %v1414 = vor.u32 %v1412, %v1413
    %v1415 = vshll.u32 920167782, %v1400
    %v1416 = vshrl.u32 1326507024, %v1401
    %v1417 = vor.u32 %v1415, %v1416
    %vm1418 = vcmp.lt.s32.totalorder %v1399, 1
    %vm1419 = vcmp.lt.s32.totalorder %v1399, 2
    %vm1420 = vcmp.lt.s32.totalorder %v1399, 3
    %vm1421 = vcmp.lt.s32.totalorder %v1399, 4
    %v1422 = vsel %vm1418, %v1402, %v1405
    %v1423 = vsel %vm1421, %v1411, 2102212464
    %v1424 = vsel %vm1420, %v1408, %v1423
    %v1425 = vsel %vm1419, %v1422, %v1424
    %v1426 = vsel %vm1418, %v1405, %v1408
    %v1427 = vsel %vm1421, %v1414, 920167782
    %v1428 = vsel %vm1420, %v1411, %v1427
    %v1429 = vsel %vm1419, %v1426, %v1428
    %v1430 = vsel %vm1418, %v1408, %v1411
    %v1431 = vsel %vm1421, %v1417, 1326507024
    %v1432 = vsel %vm1420, %v1414, %v1431
    %v1433 = vsel %vm1419, %v1430, %v1432
    %v1434 = vshll.u32 %v1394, 8
    %v1435 = vmul.u32.u64.compose %v1434, %v1433
    %v1436 = vextract.low.u32 %v1435
    %v1437 = vextract.high.u32 %v1435
    %v1438 = vmul.u32.u64.compose %v1434, %v1429
    %v1439 = vextract.low.u32 %v1438
    %v1440 = vextract.high.u32 %v1438
    %v1441 = vmul.u32 %v1434, %v1425
    %v1442 = vadd.s32 %v1437, %v1439
    %vm1443 = vc.u32 %v1437, %v1439
    %v1444 = vadd.s32 %v1440, 1
    %v1445 = vsel %vm1443, %v1444, %v1440
    %v1446 = vadd.s32 %v1441, %v1445
    %v1447 = vadd.s32 %v1446, 536870912
    %v1448 = vshrl.u32 %v1447, 30
    %v1449 = vshll.u32 %v1448, 30
    %v1450 = vsub.s32 %v1446, %v1449
    %vm1451 = vcmp.lt.s32.totalorder %v1450, 0
    %v1452 = vsub.s32 0, %v1450
    %v1453 = vsel %vm1451, %v1452, %v1450
    %v1454 = vclz %v1453
    %v1455 = vsub.s32 %v1454, 2
    %vm1456 = vcmp.gt.s32.totalorder 0, %v1455
    %v1457 = vsel %vm1456, 0, %v1455
    %v1458 = vsub.s32 32, %v1457
    %v1459 = vshll.u32 %v1450, %v1457
    %v1460 = vshrl.u32 %v1442, %v1458
    %v1461 = vor.u32 %v1459, %v1460
    %v1462 = vsub.s32 4294967266, %v1457
    %v1463 = vadd.s32 %v1462, 127
    %v1464 = vshll.u32 %v1463, 23
    %v1465 = vor.u32 4788187, %v1464
    %v1466 = vand.u32 2147483647, %v1465
    %v1468 = vcvt.s32.f32 %v1461
    %v1469 = vmul.f32 %v1468, %v1466
    %v1470 = vxor.u32 %v1469, 2147483648
    %v1471 = vsel %vm1388, %v1470, %v1469
    %v1472 = vsub.s32 4, %v1448
    %v1473 = vsel %vm1388, %v1472, %v1448
    %v1474 = vsel %vm1387, %v77, %v1471
    %v1475 = vsel %vm1387, 0, %v1473
    %v1476 = vcosq.f32.pop %v1474
    %v1477 = vsinq.f32.pop %v1474
    %vm1478 = vweird.f32 %v77
    %v1479 = vand.u32 %v1475, 3
    %vm1480 = vcmp.lt.s32.totalorder %v1479, 2
    %vm1481 = vcmp.eq.s32.totalorder %v1479, 0
    %v1482 = vxor.u32 %v1477, 2147483648
    %v1483 = vsel %vm1481, %v1476, %v1482
    %vm1484 = vcmp.eq.s32.totalorder %v1479, 2
    %v1485 = vxor.u32 %v1476, 2147483648
    %v1486 = vsel %vm1484, %v1485, %v1477
    %v1487 = vsel %vm1480, %v1483, %v1486
    %v1488 = vsel %vm1478, nan, %v1487
    %v1489 = vand.u32 2147483647, %v76
    %vm1490 = vcmp.le.f32.partialorder %v1489, 0.7853982
    %vm1491 = vcmp.lt.s32.totalorder %v76, 0
    %v1492 = vand.u32 %v76, 2139095040
    %v1493 = vshrl.u32 %v1492, 23
    %v1494 = vsub.s32 %v1493, 127
    %v1495 = vand.u32 2147483647, %v76
    %v1496 = vand.u32 %v1495, 8388607
    %v1497 = vor.u32 %v1496, 8388608
    %v1498 = vsub.s32 0, %v1497
    %v1499 = vadd.s32 %v1494, 1
    %vm1500 = vcmp.gt.s32.totalorder %v1499, 0
    %v1501 = vsel %vm1500, %v1499, 0
    %v1502 = vshrl.u32 %v1501, 5
    %v1503 = vand.u32 %v1501, 31
    %v1504 = vsub.s32 32, %v1503
    %v1505 = vshrl.u32 683565275, %v1504
    %v1506 = vshll.u32 683565275, %v1503
    %v1507 = vshrl.u32 2475754826, %v1504
    %v1508 = vor.u32 %v1506, %v1507
    %v1509 = vshll.u32 2475754826, %v1503
    %v1510 = vshrl.u32 2131351028, %v1504
    %v1511 = vor.u32 %v1509, %v1510
    %v1512 = vshll.u32 2131351028, %v1503
    %v1513 = vshrl.u32 2102212464, %v1504
    %v1514 = vor.u32 %v1512, %v1513
    %v1515 = vshll.u32 2102212464, %v1503
    %v1516 = vshrl.u32 920167782, %v1504
    %v1517 = vor.u32 %v1515, %v1516
    %v1518 = vshll.u32 920167782, %v1503
    %v1519 = vshrl.u32 1326507024, %v1504
    %v1520 = vor.u32 %v1518, %v1519
    %vm1521 = vcmp.lt.s32.totalorder %v1502, 1
    %vm1522 = vcmp.lt.s32.totalorder %v1502, 2
    %vm1523 = vcmp.lt.s32.totalorder %v1502, 3
    %vm1524 = vcmp.lt.s32.totalorder %v1502, 4
    %v1525 = vsel %vm1521, %v1505, %v1508
    %v1526 = vsel %vm1524, %v1514, 2102212464
    %v1527 = vsel %vm1523, %v1511, %v1526
    %v1528 = vsel %vm1522, %v1525, %v1527
    %v1529 = vsel %vm1521, %v1508, %v1511
    %v1530 = vsel %vm1524, %v1517, 920167782
    %v1531 = vsel %vm1523, %v1514, %v1530
    %v1532 = vsel %vm1522, %v1529, %v1531
    %v1533 = vsel %vm1521, %v1511, %v1514
    %v1534 = vsel %vm1524, %v1520, 1326507024
    %v1535 = vsel %vm1523, %v1517, %v1534
    %v1536 = vsel %vm1522, %v1533, %v1535
    %v1537 = vshll.u32 %v1497, 8
    %v1538 = vmul.u32.u64.compose %v1537, %v1536
    %v1539 = vextract.low.u32 %v1538
    %v1540 = vextract.high.u32 %v1538
    %v1541 = vmul.u32.u64.compose %v1537, %v1532
    %v1542 = vextract.low.u32 %v1541
    %v1543 = vextract.high.u32 %v1541
    %v1544 = vmul.u32 %v1537, %v1528
    %v1545 = vadd.s32 %v1540, %v1542
    %vm1546 = vc.u32 %v1540, %v1542
    %v1547 = vadd.s32 %v1543, 1
    %v1548 = vsel %vm1546, %v1547, %v1543
    %v1549 = vadd.s32 %v1544, %v1548
    %v1550 = vadd.s32 %v1549, 536870912
    %v1551 = vshrl.u32 %v1550, 30
    %v1552 = vshll.u32 %v1551, 30
    %v1553 = vsub.s32 %v1549, %v1552
    %vm1554 = vcmp.lt.s32.totalorder %v1553, 0
    %v1555 = vsub.s32 0, %v1553
    %v1556 = vsel %vm1554, %v1555, %v1553
    %v1557 = vclz %v1556
    %v1558 = vsub.s32 %v1557, 2
    %vm1559 = vcmp.gt.s32.totalorder 0, %v1558
    %v1560 = vsel %vm1559, 0, %v1558
    %v1561 = vsub.s32 32, %v1560
    %v1562 = vshll.u32 %v1553, %v1560
    %v1563 = vshrl.u32 %v1545, %v1561
    %v1564 = vor.u32 %v1562, %v1563
    %v1565 = vsub.s32 4294967266, %v1560
    %v1566 = vadd.s32 %v1565, 127
    %v1567 = vshll.u32 %v1566, 23
    %v1568 = vor.u32 4788187, %v1567
    %v1569 = vand.u32 2147483647, %v1568
    %v1571 = vcvt.s32.f32 %v1564
    %v1572 = vmul.f32 %v1571, %v1569
    %v1573 = vxor.u32 %v1572, 2147483648
    %v1574 = vsel %vm1491, %v1573, %v1572
    %v1575 = vsub.s32 4, %v1551
    %v1576 = vsel %vm1491, %v1575, %v1551
    %v1577 = vsel %vm1490, %v76, %v1574
    %v1578 = vsel %vm1490, 0, %v1576
    %v1579 = vcosq.f32.pop %v1577
    %v1580 = vsinq.f32.pop %v1577
    %vm1581 = vweird.f32 %v76
    %v1582 = vadd.s32 %v1578, 3
    %v1583 = vand.u32 %v1582, 3
    %vm1584 = vcmp.lt.s32.totalorder %v1583, 2
    %vm1585 = vcmp.eq.s32.totalorder %v1583, 0
    %v1586 = vxor.u32 %v1580, 2147483648
    %v1587 = vsel %vm1585, %v1579, %v1586
    %vm1588 = vcmp.eq.s32.totalorder %v1583, 2
    %v1589 = vxor.u32 %v1579, 2147483648
    %v1590 = vsel %vm1588, %v1589, %v1580
    %v1591 = vsel %vm1584, %v1587, %v1590
    %v1592 = vsel %vm1581, nan, %v1591
    %v1593 = vand.u32 2147483647, %v77
    %vm1594 = vcmp.le.f32.partialorder %v1593, 0.7853982
    %vm1595 = vcmp.lt.s32.totalorder %v77, 0
    %v1596 = vand.u32 %v77, 2139095040
    %v1597 = vshrl.u32 %v1596, 23
    %v1598 = vsub.s32 %v1597, 127
    %v1599 = vand.u32 2147483647, %v77
    %v1600 = vand.u32 %v1599, 8388607
    %v1601 = vor.u32 %v1600, 8388608
    %v1602 = vsub.s32 0, %v1601
    %v1603 = vadd.s32 %v1598, 1
    %vm1604 = vcmp.gt.s32.totalorder %v1603, 0
    %v1605 = vsel %vm1604, %v1603, 0
    %v1606 = vshrl.u32 %v1605, 5
    %v1607 = vand.u32 %v1605, 31
    %v1608 = vsub.s32 32, %v1607
    %v1609 = vshrl.u32 683565275, %v1608
    %v1610 = vshll.u32 683565275, %v1607
    %v1611 = vshrl.u32 2475754826, %v1608
    %v1612 = vor.u32 %v1610, %v1611
    %v1613 = vshll.u32 2475754826, %v1607
    %v1614 = vshrl.u32 2131351028, %v1608
    %v1615 = vor.u32 %v1613, %v1614
    %v1616 = vshll.u32 2131351028, %v1607
    %v1617 = vshrl.u32 2102212464, %v1608
    %v1618 = vor.u32 %v1616, %v1617
    %v1619 = vshll.u32 2102212464, %v1607
    %v1620 = vshrl.u32 920167782, %v1608
    %v1621 = vor.u32 %v1619, %v1620
    %v1622 = vshll.u32 920167782, %v1607
    %v1623 = vshrl.u32 1326507024, %v1608
    %v1624 = vor.u32 %v1622, %v1623
    %vm1625 = vcmp.lt.s32.totalorder %v1606, 1
    %vm1626 = vcmp.lt.s32.totalorder %v1606, 2
    %vm1627 = vcmp.lt.s32.totalorder %v1606, 3
    %vm1628 = vcmp.lt.s32.totalorder %v1606, 4
    %v1629 = vsel %vm1625, %v1609, %v1612
    %v1630 = vsel %vm1628, %v1618, 2102212464
    %v1631 = vsel %vm1627, %v1615, %v1630
    %v1632 = vsel %vm1626, %v1629, %v1631
    %v1633 = vsel %vm1625, %v1612, %v1615
    %v1634 = vsel %vm1628, %v1621, 920167782
    %v1635 = vsel %vm1627, %v1618, %v1634
    %v1636 = vsel %vm1626, %v1633, %v1635
    %v1637 = vsel %vm1625, %v1615, %v1618
    %v1638 = vsel %vm1628, %v1624, 1326507024
    %v1639 = vsel %vm1627, %v1621, %v1638
    %v1640 = vsel %vm1626, %v1637, %v1639
    %v1641 = vshll.u32 %v1601, 8
    %v1642 = vmul.u32.u64.compose %v1641, %v1640
    %v1643 = vextract.low.u32 %v1642
    %v1644 = vextract.high.u32 %v1642
    %v1645 = vmul.u32.u64.compose %v1641, %v1636
    %v1646 = vextract.low.u32 %v1645
    %v1647 = vextract.high.u32 %v1645
    %v1648 = vmul.u32 %v1641, %v1632
    %v1649 = vadd.s32 %v1644, %v1646
    %vm1650 = vc.u32 %v1644, %v1646
    %v1651 = vadd.s32 %v1647, 1
    %v1652 = vsel %vm1650, %v1651, %v1647
    %v1653 = vadd.s32 %v1648, %v1652
    %v1654 = vadd.s32 %v1653, 536870912
    %v1655 = vshrl.u32 %v1654, 30
    %v1656 = vshll.u32 %v1655, 30
    %v1657 = vsub.s32 %v1653, %v1656
    %vm1658 = vcmp.lt.s32.totalorder %v1657, 0
    %v1659 = vsub.s32 0, %v1657
    %v1660 = vsel %vm1658, %v1659, %v1657
    %v1661 = vclz %v1660
    %v1662 = vsub.s32 %v1661, 2
    %vm1663 = vcmp.gt.s32.totalorder 0, %v1662
    %v1664 = vsel %vm1663, 0, %v1662
    %v1665 = vsub.s32 32, %v1664
    %v1666 = vshll.u32 %v1657, %v1664
    %v1667 = vshrl.u32 %v1649, %v1665
    %v1668 = vor.u32 %v1666, %v1667
    %v1669 = vsub.s32 4294967266, %v1664
    %v1670 = vadd.s32 %v1669, 127
    %v1671 = vshll.u32 %v1670, 23
    %v1672 = vor.u32 4788187, %v1671
    %v1673 = vand.u32 2147483647, %v1672
    %v1675 = vcvt.s32.f32 %v1668
    %v1676 = vmul.f32 %v1675, %v1673
    %v1677 = vxor.u32 %v1676, 2147483648
    %v1678 = vsel %vm1595, %v1677, %v1676
    %v1679 = vsub.s32 4, %v1655
    %v1680 = vsel %vm1595, %v1679, %v1655
    %v1681 = vsel %vm1594, %v77, %v1678
    %v1682 = vsel %vm1594, 0, %v1680
    %v1683 = vcosq.f32.pop %v1681
    %v1684 = vsinq.f32.pop %v1681
    %vm1685 = vweird.f32 %v77
    %v1686 = vadd.s32 %v1682, 3
    %v1687 = vand.u32 %v1686, 3
    %vm1688 = vcmp.lt.s32.totalorder %v1687, 2
    %vm1689 = vcmp.eq.s32.totalorder %v1687, 0
    %v1690 = vxor.u32 %v1684, 2147483648
    %v1691 = vsel %vm1689, %v1683, %v1690
    %vm1692 = vcmp.eq.s32.totalorder %v1687, 2
    %v1693 = vxor.u32 %v1683, 2147483648
    %v1694 = vsel %vm1692, %v1693, %v1684
    %v1695 = vsel %vm1688, %v1691, %v1694
    %v1696 = vsel %vm1685, nan, %v1695
    %v1699 = vrot.slane %v1488, 7
    %1700 = vrot.lane.b32.xlu0 %v1385, 113
    %v1701 = vpop.permute.xlu0 %1700
    %1702 = vrot.lane.b32.xlu0 %v1699, 113
    %v1703 = vpop.permute.xlu0 %1702
    %v1708 = vrot.slane %v1696, 7
    %v1711 = vsel %vm91, %v1701, %v1592
    %v1712 = vsel %vm91, %v1703, %v1708
    %v1713 = vld [vmem:[#allocation8] sm:$0xff]
    %v1714 = vld [vmem:[#allocation8 + $0x8] sm:$0xff]
    %v1715 = vld [vmem:[#allocation8 + $0x10] sm:$0xff]
    %v1716 = vld [vmem:[#allocation8 + $0x18] sm:$0xff]
    %v1719 = vrot.slane %v1281, 7
    %v1720 = vrot.slane %v1282, 6
    %v1721 = vsel %vm308, %v1720, %v1719
    %1722 = vrot.lane.b32.xlu0 %v1721, 64
    %v1723 = vpop.permute.xlu0 %1722
    %v1724 = vsel %vm177, %v1723, 0
    %1726 = vmatprep.subr.mxu0 0.0
    %1727 = vmatpush1.msra.mxu0 %v1713
    %1728 = vmatprep.subr.mxu0 0.0
    %1729 = vmatpush1.msra.mxu0 %v1714
    %1730 = vmatprep.subr.mxu0 0.0
    %1731 = vmatpush1.msra.mxu0 %v1715
    %1732 = vmatprep.subr.mxu0 0.0
    %1733 = vmatpush1.msra.mxu0 %v1716
    %1734 = vmatprep.subr.mxu0 0.0
    %1735 = vmatpush1.msra.mxu0 0.0
    %1736 = vmatprep.subr.mxu0 0.0
    %1737 = vmatpush1.msra.mxu0 0.0
    %1738 = vmatprep.subr.mxu0 0.0
    %1739 = vmatpush1.msra.mxu0 0.0
    %1740 = vmatprep.subr.mxu0 0.0
    %1741 = vmatpush1.msra.mxu0 0.0
    %1742 = vmatprep.subr.mxu0 0.0
    %1743 = vmatpush1.msra.mxu0 0.0
    %1744 = vmatprep.subr.mxu0 0.0
    %1745 = vmatpush1.msra.mxu0 0.0
    %1746 = vmatprep.subr.mxu0 0.0
    %1747 = vmatpush1.msra.mxu0 0.0
    %1748 = vmatprep.subr.mxu0 0.0
    %1749 = vmatpush1.msra.mxu0 0.0
    %1750 = vmatprep.subr.mxu0 0.0
    %1751 = vmatpush1.msra.mxu0 0.0
    %1752 = vmatprep.subr.mxu0 0.0
    %1753 = vmatpush1.msra.mxu0 0.0
    %1754 = vmatprep.subr.mxu0 0.0
    %1755 = vmatpush1.msra.mxu0 0.0
    %1756 = vmatprep.subr.mxu0 0.0
    %1757 = vmatpush1.msra.mxu0 0.0
    %1758 = vmatprep.subr.mxu0 0.0
    %1759 = vmatpush1.msra.mxu0 0.0
    %1760 = vmatprep.subr.mxu0 0.0
    %1761 = vmatpush1.msra.mxu0 0.0
    %1762 = vmatprep.subr.mxu0 0.0
    %1763 = vmatpush1.msra.mxu0 0.0
    %1764 = vmatprep.subr.mxu0 0.0
    %1765 = vmatpush1.msra.mxu0 0.0
    %1766 = vmatprep.subr.mxu0 0.0
    %1767 = vmatpush1.msra.mxu0 0.0
    %1768 = vmatprep.subr.mxu0 0.0
    %1769 = vmatpush1.msra.mxu0 0.0
    %1770 = vmatprep.subr.mxu0 0.0
    %1771 = vmatpush1.msra.mxu0 0.0
    %1772 = vmatprep.subr.mxu0 0.0
    %1773 = vmatpush1.msra.mxu0 0.0
    %1774 = vmatprep.subr.mxu0 0.0
    %1775 = vmatpush1.msra.mxu0 0.0
    %1776 = vmatprep.subr.mxu0 0.0
    %1777 = vmatpush1.msra.mxu0 0.0
    %1778 = vmatprep.subr.mxu0 0.0
    %1779 = vmatpush1.msra.mxu0 0.0
    %1780 = vmatprep.subr.mxu0 0.0
    %1781 = vmatpush1.msra.mxu0 0.0
    %1782 = vmatprep.subr.mxu0 0.0
    %1783 = vmatpush1.msra.mxu0 0.0
    %1784 = vmatprep.subr.mxu0 0.0
    %1785 = vmatpush1.msra.mxu0 0.0
    %1786 = vmatprep.subr.mxu0 0.0
    %1787 = vmatpush1.msra.mxu0 0.0
    %1788 = vmatprep.subr.mxu0 0.0
    %1789 = vmatpush1.msra.mxu0 0.0
    %1790 = vmatprep.mubr.f32.mxu0 0.0
    %1791 = vmatmul.mubr.f32.gmra.mrb[0].mxu0 %v1724
    %v1792 = vpop.f32.mrb[0].mxu0
    %v1793 = vadd.f32 0.0, %v1792
    %v1794 = vpop.f32.mrb[0].mxu0
    %1795 = vdwg.mxu0
    %vm1798 = vcmask 1040384
    %v1799 = vrot.slane %v1711, 7
    %v1800 = vrot.slane %v1712, 7
    %v1801 = vsel %vm1798, %v1799, %v1800
    %vm1802 = vcmask 244736
    %v1804 = vsel %vm1802, %v1793, 0
    %v1806 = vsel %vm1802, %v1801, 0
    %1808 = vmatprep.subr.mxu0 0.0
    %1809 = vmatpush1.xpose.msra.mxu0 %v1806
    %1810 = vmatprep.subr.mxu0 0.0
    %1811 = vmatpush1.xpose.msra.mxu0 0.0
    %1812 = vmatprep.subr.mxu0 0.0
    %1813 = vmatpush1.xpose.msra.mxu0 0.0
    %1814 = vmatprep.subr.mxu0 0.0
    %1815 = vmatpush1.xpose.msra.mxu0 0.0
    %1816 = vmatprep.subr.mxu0 0.0
    %1817 = vmatpush1.xpose.msra.mxu0 0.0
    %1818 = vmatprep.subr.mxu0 0.0
    %1819 = vmatpush1.xpose.msra.mxu0 0.0
    %1820 = vmatprep.subr.mxu0 0.0
    %1821 = vmatpush1.xpose.msra.mxu0 0.0
    %1822 = vmatprep.subr.mxu0 0.0
    %1823 = vmatpush1.xpose.msra.mxu0 0.0
    %1824 = vmatprep.subr.mxu0 0.0
    %1825 = vmatpush1.xpose.msra.mxu0 0.0
    %1826 = vmatprep.subr.mxu0 0.0
    %1827 = vmatpush1.xpose.msra.mxu0 0.0
    %1828 = vmatprep.subr.mxu0 0.0
    %1829 = vmatpush1.xpose.msra.mxu0 0.0
    %1830 = vmatprep.subr.mxu0 0.0
    %1831 = vmatpush1.xpose.msra.mxu0 0.0
    %1832 = vmatprep.subr.mxu0 0.0
    %1833 = vmatpush1.xpose.msra.mxu0 0.0
    %1834 = vmatprep.subr.mxu0 0.0
    %1835 = vmatpush1.xpose.msra.mxu0 0.0
    %1836 = vmatprep.subr.mxu0 0.0
    %1837 = vmatpush1.xpose.msra.mxu0 0.0
    %1838 = vmatprep.subr.mxu0 0.0
    %1839 = vmatpush1.xpose.msra.mxu0 0.0
    %1840 = vmatprep.subr.mxu0 0.0
    %1841 = vmatpush1.xpose.msra.mxu0 0.0
    %1842 = vmatprep.subr.mxu0 0.0
    %1843 = vmatpush1.xpose.msra.mxu0 0.0
    %1844 = vmatprep.subr.mxu0 0.0
    %1845 = vmatpush1.xpose.msra.mxu0 0.0
    %1846 = vmatprep.subr.mxu0 0.0
    %1847 = vmatpush1.xpose.msra.mxu0 0.0
    %1848 = vmatprep.subr.mxu0 0.0
    %1849 = vmatpush1.xpose.msra.mxu0 0.0
    %1850 = vmatprep.subr.mxu0 0.0
    %1851 = vmatpush1.xpose.msra.mxu0 0.0
    %1852 = vmatprep.subr.mxu0 0.0
    %1853 = vmatpush1.xpose.msra.mxu0 0.0
    %1854 = vmatprep.subr.mxu0 0.0
    %1855 = vmatpush1.xpose.msra.mxu0 0.0
    %1856 = vmatprep.subr.mxu0 0.0
    %1857 = vmatpush1.xpose.msra.mxu0 0.0
    %1858 = vmatprep.subr.mxu0 0.0
    %1859 = vmatpush1.xpose.msra.mxu0 0.0
    %1860 = vmatprep.subr.mxu0 0.0
    %1861 = vmatpush1.xpose.msra.mxu0 0.0
    %1862 = vmatprep.subr.mxu0 0.0
    %1863 = vmatpush1.xpose.msra.mxu0 0.0
    %1864 = vmatprep.subr.mxu0 0.0
    %1865 = vmatpush1.xpose.msra.mxu0 0.0
    %1866 = vmatprep.subr.mxu0 0.0
    %1867 = vmatpush1.xpose.msra.mxu0 0.0
    %1868 = vmatprep.subr.mxu0 0.0
    %1869 = vmatpush1.xpose.msra.mxu0 0.0
    %1870 = vmatprep.subr.mxu0 0.0
    %1871 = vmatpush1.xpose.msra.mxu0 0.0
    %1872 = vmatprep.mubr.f32.mxu0 0.0
    %1873 = vmatmul.mubr.f32.gmra.mrb[0].mxu0 %v1804
    %v1874 = vpop.f32.mrb[0].mxu0
    %v1875 = vadd.f32 0.0, %v1874
    %v1876 = vpop.f32.mrb[0].mxu0
    %1877 = vdwg.mxu0
    %1878 = vrot.lane.b32.xlu0 %v1793, 98
    %v1879 = vpop.permute.xlu0 %1878
    %v1880 = vsel %vm1802, %v1879, 0
    %1882 = vmatprep.subr.mxu0 0.0
    %1883 = vmatpush1.xpose.msra.mxu0 %v1806
    %1884 = vmatprep.subr.mxu0 0.0
    %1885 = vmatpush1.xpose.msra.mxu0 0.0
    %1886 = vmatprep.subr.mxu0 0.0
    %1887 = vmatpush1.xpose.msra.mxu0 0.0
    %1888 = vmatprep.subr.mxu0 0.0
    %1889 = vmatpush1.xpose.msra.mxu0 0.0
    %1890 = vmatprep.subr.mxu0 0.0
    %1891 = vmatpush1.xpose.msra.mxu0 0.0
    %1892 = vmatprep.subr.mxu0 0.0
    %1893 = vmatpush1.xpose.msra.mxu0 0.0
    %1894 = vmatprep.subr.mxu0 0.0
    %1895 = vmatpush1.xpose.msra.mxu0 0.0
    %1896 = vmatprep.subr.mxu0 0.0
    %1897 = vmatpush1.xpose.msra.mxu0 0.0
    %1898 = vmatprep.subr.mxu0 0.0
    %1899 = vmatpush1.xpose.msra.mxu0 0.0
    %1900 = vmatprep.subr.mxu0 0.0
    %1901 = vmatpush1.xpose.msra.mxu0 0.0
    %1902 = vmatprep.subr.mxu0 0.0
    %1903 = vmatpush1.xpose.msra.mxu0 0.0
    %1904 = vmatprep.subr.mxu0 0.0
    %1905 = vmatpush1.xpose.msra.mxu0 0.0
    %1906 = vmatprep.subr.mxu0 0.0
    %1907 = vmatpush1.xpose.msra.mxu0 0.0
    %1908 = vmatprep.subr.mxu0 0.0
    %1909 = vmatpush1.xpose.msra.mxu0 0.0
    %1910 = vmatprep.subr.mxu0 0.0
    %1911 = vmatpush1.xpose.msra.mxu0 0.0
    %1912 = vmatprep.subr.mxu0 0.0
    %1913 = vmatpush1.xpose.msra.mxu0 0.0
    %1914 = vmatprep.subr.mxu0 0.0
    %1915 = vmatpush1.xpose.msra.mxu0 0.0
    %1916 = vmatprep.subr.mxu0 0.0
    %1917 = vmatpush1.xpose.msra.mxu0 0.0
    %1918 = vmatprep.subr.mxu0 0.0
    %1919 = vmatpush1.xpose.msra.mxu0 0.0
    %1920 = vmatprep.subr.mxu0 0.0
    %1921 = vmatpush1.xpose.msra.mxu0 0.0
    %1922 = vmatprep.subr.mxu0 0.0
    %1923 = vmatpush1.xpose.msra.mxu0 0.0
    %1924 = vmatprep.subr.mxu0 0.0
    %1925 = vmatpush1.xpose.msra.mxu0 0.0
    %1926 = vmatprep.subr.mxu0 0.0
    %1927 = vmatpush1.xpose.msra.mxu0 0.0
    %1928 = vmatprep.subr.mxu0 0.0
    %1929 = vmatpush1.xpose.msra.mxu0 0.0
    %1930 = vmatprep.subr.mxu0 0.0
    %1931 = vmatpush1.xpose.msra.mxu0 0.0
    %1932 = vmatprep.subr.mxu0 0.0
    %1933 = vmatpush1.xpose.msra.mxu0 0.0
    %1934 = vmatprep.subr.mxu0 0.0
    %1935 = vmatpush1.xpose.msra.mxu0 0.0
    %1936 = vmatprep.subr.mxu0 0.0
    %1937 = vmatpush1.xpose.msra.mxu0 0.0
    %1938 = vmatprep.subr.mxu0 0.0
    %1939 = vmatpush1.xpose.msra.mxu0 0.0
    %1940 = vmatprep.subr.mxu0 0.0
    %1941 = vmatpush1.xpose.msra.mxu0 0.0
    %1942 = vmatprep.subr.mxu0 0.0
    %1943 = vmatpush1.xpose.msra.mxu0 0.0
    %1944 = vmatprep.subr.mxu0 0.0
    %1945 = vmatpush1.xpose.msra.mxu0 0.0
    %1946 = vmatprep.mubr.f32.mxu0 0.0
    %1947 = vmatmul.mubr.f32.gmra.mrb[0].mxu0 %v1880
    %v1948 = vpop.f32.mrb[0].mxu0
    %v1949 = vadd.f32 0.0, %v1948
    %v1950 = vpop.f32.mrb[0].mxu0
    %1951 = vdwg.mxu0
    %vm1952 = vcmask 9216
    %1953 = vst.msk [vmem:[#allocation10] sm:$0x3] %vm1952, %v1875
    %1955 = vrot.lane.b32.xlu0 %v1949, 2
    %v1956 = vpop.permute.xlu0 %1955
    %vm1958 = vcmask 25616
    %1959 = vst.msk [vmem:[#allocation10] sm:$0x3] %vm1958, %v1956
    // Predicated region
    $region38: #{vdlstm_forward.1} parent=1 // pred_check
      _
    $region39: #{vdlstm_forward.1} parent=1 // pred_check_branch
      %1961 = sbr.rel (0) target = $region41
    $region40: #{vdlstm_forward.1} parent=1 // pred_region
      %s1963 = ssub.s32 32, 32
      %1964 = vsyncadd [#allocation4], %s1963
      %s1966 = sshll.u32 [#allocation10], 4
      %s1967 = int_to_ptr.vmem [resolvable:$true] %s1966
      %1969 = dma.vmem_to_hbm [thread:$0]  %s1967, 32, %s5, [#allocation4]
    $region41: #{vdlstm_forward.1} parent=1 // pred_fallthru
      _
    // Predicated region
    $region42: #{vdlstm_forward.1} parent=1 // pred_check
      _
    $region43: #{vdlstm_forward.1} parent=1 // pred_check_branch
      %1971 = sbr.rel (0) target = $region45
    $region44: #{vdlstm_forward.1} parent=1 // pred_region
      %1972 = dma.done [#allocation4], 32
    $region45: #{vdlstm_forward.1} parent=1 // pred_fallthru
      _
    %1973 = vsyncpa [#allocation3], 1
    %1974 = vsyncpa [#allocation6], 1
    %1975 = vsyncpa [#allocation9], 1
    %1976 = vsyncpa [#allocation4], 1

</llo_original>
